<compile_context>
chip_gen: v5e
topology: v5e:2x2
jax: 0.10.0
libtpu: 0.0.40
codegen_flags: <defaults>
</compile_context>

<pallas_src>
import jax
import jax.numpy as jnp
from jax.experimental import pallas as pl
from jax.experimental.pallas import tpu as pltpu

NUM_CHANNELS = 1
NUM_FEATURES = 64
LRELU_SLOPE = 0.2
BN_EPS = 1e-5


def _pick_block_rows(m, cap):
    """Largest divisor of m that is a multiple of 8 and <= cap (else m)."""
    t = (cap // 8) * 8
    while t >= 8:
        if m % t == 0:
            return t
        t -= 8
    return m


# --------------------- kernel 1: conv1 matmul + LeakyReLU -------------------

def _conv1_kernel(p_ref, w_ref, b_ref, o_ref):
    acc = jnp.dot(p_ref[...], w_ref[...], preferred_element_type=jnp.float32)
    acc = acc + b_ref[...]
    acc = jnp.where(acc >= 0.0, acc, LRELU_SLOPE * acc)
    o_ref[...] = acc.astype(o_ref.dtype)


def conv1_matmul(p, w, b):
    """p: (M, 50) bf16 paired patches, w: (50, 128) bf16 block-diag, b: (1,128) f32."""
    m, k = p.shape
    c = w.shape[1]
    tm = _pick_block_rows(m, 1024)
    return pl.pallas_call(
        _conv1_kernel,
        out_shape=jax.ShapeDtypeStruct((m, c), jnp.bfloat16),
        grid=(m // tm,),
        in_specs=[
            pl.BlockSpec((tm, k), lambda i: (i, 0)),
            pl.BlockSpec((k, c), lambda i: (0, 0)),   # weights stay resident
            pl.BlockSpec((1, c), lambda i: (0, 0)),   # bias stays resident
        ],
        out_specs=pl.BlockSpec((tm, c), lambda i: (i, 0)),
        compiler_params=pltpu.CompilerParams(dimension_semantics=("parallel",)),
    )(p, w, b)


# ------------- kernel 2: conv2 matmul + bias + BN partial sums --------------

def _conv2_kernel(p_ref, w_ref, b_ref, y_ref, s_ref):
    acc = jnp.dot(p_ref[...], w_ref[...], preferred_element_type=jnp.float32)
    acc = acc + b_ref[...]
    y_ref[...] = acc
    s = jnp.sum(acc, axis=0, keepdims=True)            # (1, 128)
    sq = jnp.sum(acc * acc, axis=0, keepdims=True)     # (1, 128)
    s_ref[...] = jnp.concatenate([s, sq], axis=0).reshape(1, 2, acc.shape[-1])


def conv2_matmul(p2, w2, b2):
    """p2: (16N, 1600) bf16, w2: (1600, 128) bf16, b2: (1, 128) f32."""
    m, k = p2.shape
    c = w2.shape[1]
    tm = _pick_block_rows(m, 512)
    ntiles = m // tm
    return pl.pallas_call(
        _conv2_kernel,
        out_shape=(jax.ShapeDtypeStruct((m, c), jnp.float32),
                   jax.ShapeDtypeStruct((ntiles, 2, c), jnp.float32)),
        grid=(ntiles,),
        in_specs=[
            pl.BlockSpec((tm, k), lambda i: (i, 0)),
            pl.BlockSpec((k, c), lambda i: (0, 0)),
            pl.BlockSpec((1, c), lambda i: (0, 0)),
        ],
        out_specs=(pl.BlockSpec((tm, c), lambda i: (i, 0)),
                   pl.BlockSpec((1, 2, c), lambda i: (i, 0, 0))),
        compiler_params=pltpu.CompilerParams(dimension_semantics=("parallel",)),
    )(p2, w2, b2)


# ----------- kernel 3: BN apply + fc1 + LeakyReLU + fc2 (epilogue) ----------

def _head_kernel(y_ref, sc_ref, sh_ref, w1_ref, b1_ref, w3_ref, b3_ref, o_ref):
    y = y_ref[...] * sc_ref[...] + sh_ref[...]                       # BN as scale/shift
    h = jnp.dot(y.astype(jnp.bfloat16), w1_ref[...],
                preferred_element_type=jnp.float32) + b1_ref[...]    # fc1 (one contraction)
    h = jnp.where(h >= 0.0, h, LRELU_SLOPE * h)
    out = jnp.sum(h * w3_ref[...], axis=-1, keepdims=True) + b3_ref[...]   # fc2 on VPU
    o_ref[...] = out


def head_forward(y2_flat, scale, shift, w1, b1, w3, b3):
    n, f = y2_flat.shape
    nf = w1.shape[1]
    tb = _pick_block_rows(n, 256)
    return pl.pallas_call(
        _head_kernel,
        out_shape=jax.ShapeDtypeStruct((n, 1), jnp.float32),
        grid=(n // tb,),
        in_specs=[
            pl.BlockSpec((tb, f), lambda i: (i, 0)),
            pl.BlockSpec((1, f), lambda i: (0, 0)),
            pl.BlockSpec((1, f), lambda i: (0, 0)),
            pl.BlockSpec((f, nf), lambda i: (0, 0)),
            pl.BlockSpec((1, nf), lambda i: (0, 0)),
            pl.BlockSpec((1, nf), lambda i: (0, 0)),
            pl.BlockSpec((1, 1), lambda i: (0, 0)),
        ],
        out_specs=pl.BlockSpec((tb, 1), lambda i: (i, 0)),
        compiler_params=pltpu.CompilerParams(dimension_semantics=("parallel",)),
    )(y2_flat, scale, shift, w1, b1, w3, b3)


# ------------------------------- JAX glue ----------------------------------

def init_params(key):
    ks = jax.random.split(key, 8)

    def u(k, shape, fan_in):
        bound = 1.0 / jnp.sqrt(float(fan_in))
        return jax.random.uniform(k, shape, jnp.float32, -bound, bound)

    nf = NUM_FEATURES
    return {
        'conv1_w': u(ks[0], (nf, NUM_CHANNELS, 5, 5), NUM_CHANNELS * 25),
        'conv1_b': u(ks[1], (nf,), NUM_CHANNELS * 25),
        'conv2_w': u(ks[2], (2 * nf, nf, 5, 5), nf * 25),
        'conv2_b': u(ks[3], (2 * nf,), nf * 25),
        'bn_gamma': jnp.ones((2 * nf,), jnp.float32),   # fresh BatchNorm2d init
        'bn_beta': jnp.zeros((2 * nf,), jnp.float32),
        'fc1_w': u(ks[4], (nf, 2 * nf * 4 * 4), 2 * nf * 16),
        'fc1_b': u(ks[5], (nf,), 2 * nf * 16),
        'fc2_w': u(ks[6], (1, nf), nf),
        'fc2_b': u(ks[7], (1,), nf),
    }


def model_d_forward(params, x):
    """x: (N, 1, 28, 28) NCHW float32 -> (N, 1) float32 logits."""
    n = x.shape[0]
    nf = NUM_FEATURES
    assert x.shape[1:] == (NUM_CHANNELS, 28, 28), x.shape

    # ---- conv1 im2col: rows (n, oh, ow), cols (kh, kw) ---------------------
    # TODO(synk): fusing the strided patch-window gather into the Pallas
    # kernels (fully on-chip conv1->conv2) needs in-kernel strided slices that
    # do not lower cleanly in Mosaic; the patch builds stay as fused XLA
    # slice/stack glue on the small input / bf16 y1 slabs.
    xs = x[:, 0]                                                   # (N, 28, 28)
    cols = [xs[:, kh:kh + 24:2, kw:kw + 24:2]                      # (N, 12, 12)
            for kh in range(5) for kw in range(5)]
    p1 = jnp.stack(cols, axis=-1).reshape(n * 144, 25)
    # pair two spatial positions per row -> lane-dense 128-wide conv1 output;
    # the (n*144, 25) -> (n*72, 50) reshape is a free row-major bitcast.
    p1 = p1.reshape(n * 72, 50).astype(jnp.bfloat16)

    w1c = params['conv1_w'].reshape(nf, 25).T                      # (25, 64)
    w1p = jnp.zeros((50, 2 * nf), jnp.float32)
    w1p = w1p.at[:25, :nf].set(w1c).at[25:, nf:].set(w1c)          # block-diag
    w1p = w1p.astype(jnp.bfloat16)                                 # (50, 128)
    b1p = jnp.concatenate([params['conv1_b'], params['conv1_b']]).reshape(1, 2 * nf)

    y1 = conv1_matmul(p1, w1p, b1p)                                # (72N, 128) bf16
    y1 = y1.reshape(n, 12, 12, nf)                                 # channel-last, free

    # ---- conv2 im2col: rows batch-major (n, oh, ow), cols (kh, kw, ci) -----
    cols = [y1[:, kh:kh + 8:2, kw:kw + 8:2, :]                     # (N, 4, 4, 64)
            for kh in range(5) for kw in range(5)]
    p2 = jnp.concatenate(cols, axis=-1).reshape(n * 16, 25 * nf)   # (16N, 1600) bf16

    w2 = params['conv2_w'].transpose(2, 3, 1, 0).reshape(25 * nf, 2 * nf)
    w2 = w2.astype(jnp.bfloat16)                                   # (1600, 128)
    b2 = params['conv2_b'].reshape(1, 2 * nf)

    y2, part = conv2_matmul(p2, w2, b2)                            # (16N, 128) f32

    # ---- BatchNorm2d (train-mode batch stats) folded into scale/shift ------
    m2 = jnp.float32(16 * n)
    mean = jnp.sum(part[:, 0, :], axis=0) / m2
    var = jnp.maximum(jnp.sum(part[:, 1, :], axis=0) / m2 - mean * mean, 0.0)
    scale = params['bn_gamma'] * jax.lax.rsqrt(var + BN_EPS)
    shift = params['bn_beta'] - mean * scale
    # y2_flat columns are ordered (spatial p major, channel c minor)
    scale_f = jnp.tile(scale, 16).reshape(1, 16 * 2 * nf)          # (1, 2048)
    shift_f = jnp.tile(shift, 16).reshape(1, 16 * 2 * nf)

    # ---- fc1 weight with the PyTorch NCHW .view(-1, 2048) folded in --------
    # PyTorch feature index = c*16 + p; ours = p*128 + c  ->  permute once.
    w_fc1 = params['fc1_w'].reshape(nf, 2 * nf, 16).transpose(2, 1, 0)
    w_fc1 = w_fc1.reshape(16 * 2 * nf, nf).astype(jnp.bfloat16)    # (2048, 64)
    b_fc1 = params['fc1_b'].reshape(1, nf)
    w_fc2 = params['fc2_w'].reshape(1, nf)                         # VPU row
    b_fc2 = params['fc2_b'].reshape(1, 1)

    y2_flat = y2.reshape(n, 16 * 2 * nf)                           # free bitcast
    return head_forward(y2_flat, scale_f, shift_f, w_fc1, b_fc1, w_fc2, b_fc2)


# -------------------------- pure-JAX reference -----------------------------

def reference_forward(params, x):
    dn = ('NCHW', 'OIHW', 'NCHW')
    y = jax.lax.conv_general_dilated(x, params['conv1_w'], (2, 2), 'VALID',
                                     dimension_numbers=dn)
    y = y + params['conv1_b'][None, :, None, None]
    y = jnp.where(y >= 0, y, LRELU_SLOPE * y)
    y = jax.lax.conv_general_dilated(y, params['conv2_w'], (2, 2), 'VALID',
                                     dimension_numbers=dn)
    y = y + params['conv2_b'][None, :, None, None]
    mean = jnp.mean(y, axis=(0, 2, 3), keepdims=True)
    var = jnp.mean((y - mean) ** 2, axis=(0, 2, 3), keepdims=True)
    y = ((y - mean) * jax.lax.rsqrt(var + BN_EPS)
         * params['bn_gamma'][None, :, None, None]
         + params['bn_beta'][None, :, None, None])
    y = y.reshape(x.shape[0], -1)
    y = y @ params['fc1_w'].T + params['fc1_b']
    y = jnp.where(y >= 0, y, LRELU_SLOPE * y)
    y = y @ params['fc2_w'].T + params['fc2_b']
    return y


# --------------------------------- main -------------------------------------

if __name__ == "__main__":
    key = jax.random.PRNGKey(0)
    k_param, k_x = jax.random.split(key)

    params = init_params(k_param)
    # 28x28 input so conv1 -> 12x12 and conv2 -> 4x4 match fc1's expected
    # 128*4*4 = 2048 flattened features (MNIST-style input).
    x = jax.random.normal(k_x, (2, NUM_CHANNELS, 28, 28), jnp.float32)

    out = jax.block_until_ready(jax.jit(model_d_forward)(params, x))
    ref = jax.block_until_ready(jax.jit(reference_forward)(params, x))

    assert out.shape == (2, 1), out.shape
    assert bool(jnp.all(jnp.isfinite(out)))
    # loose tolerance: kernels use bf16 MXU operands with f32 accumulation
    assert bool(jnp.allclose(out, ref, rtol=5e-2, atol=5e-2)), (out, ref)

    print("KERNEL_OK")
</pallas_src>

<mosaic_0001>
module attributes {stable_mosaic.version = 11 : i64} {
  func.func @_conv1_kernel(%arg0: i32, %arg1: memref<144x50xbf16, #tpu.memory_space<vmem>>, %arg2: memref<50x128xbf16, #tpu.memory_space<vmem>>, %arg3: memref<1x128xf32, #tpu.memory_space<vmem>>, %arg4: memref<144x128xbf16, #tpu.memory_space<vmem>>) attributes {dimension_semantics = [#tpu.dimension_semantics<parallel>], iteration_bounds = array<i64: 1>, scalar_prefetch = 0 : i64, scratch_operands = 0 : i64, tpu.core_type = #tpu.core_type<tc>, window_params = [{transform_indices = @transform_0, window_bounds = array<i64: 144, 50>}, {pipeline_mode = #tpu.pipeline_mode<synchronous>, transform_indices = @transform_1, window_bounds = array<i64: 50, 128>}, {pipeline_mode = #tpu.pipeline_mode<synchronous>, transform_indices = @transform_2, window_bounds = array<i64: 1, 128>}, {transform_indices = @transform_3, window_bounds = array<i64: 144, 128>}]} {
    %c0 = arith.constant 0 : index
    %c0_0 = arith.constant 0 : index
    %0 = vector.load %arg1[%c0, %c0_0] : memref<144x50xbf16, #tpu.memory_space<vmem>>, vector<144x50xbf16>
    %c0_1 = arith.constant 0 : index
    %c0_2 = arith.constant 0 : index
    %1 = vector.load %arg2[%c0_1, %c0_2] : memref<50x128xbf16, #tpu.memory_space<vmem>>, vector<50x128xbf16>
    %cst = arith.constant dense<0.000000e+00> : vector<144x128xf32>
    %2 = tpu.matmul %0, %1, %cst {dimension_numbers = #tpu.dot_dimension_numbers<[1], [0], [0], [1], [0, 0, 1, 1], [], []>} : vector<144x50xbf16>, vector<50x128xbf16>, vector<144x128xf32> -> vector<144x128xf32>
    %c0_3 = arith.constant 0 : index
    %c0_4 = arith.constant 0 : index
    %3 = vector.load %arg3[%c0_3, %c0_4] : memref<1x128xf32, #tpu.memory_space<vmem>>, vector<1x128xf32>
    %4 = vector.broadcast %3 : vector<1x128xf32> to vector<144x128xf32>
    %5 = arith.addf %2, %4 : vector<144x128xf32>
    %cst_5 = arith.constant 0.000000e+00 : f32
    %6 = vector.broadcast %cst_5 : f32 to vector<144x128xf32>
    %7 = arith.cmpf oge, %5, %6 : vector<144x128xf32>
    %cst_6 = arith.constant 2.000000e-01 : f32
    %8 = vector.broadcast %cst_6 : f32 to vector<144x128xf32>
    %9 = arith.mulf %8, %5 : vector<144x128xf32>
    %10 = arith.select %7, %5, %9 : vector<144x128xi1>, vector<144x128xf32>
    %11 = arith.truncf %10 : vector<144x128xf32> to vector<144x128xbf16>
    %c0_7 = arith.constant 0 : index
    %c0_8 = arith.constant 0 : index
    %12 = vector.load %arg4[%c0_7, %c0_8] : memref<144x128xbf16, #tpu.memory_space<vmem>>, vector<144x128xbf16>
    tpu.vector_store %arg4[%c0_7, %c0_8], %11 {strides = array<i32>} : memref<144x128xbf16, #tpu.memory_space<vmem>>, vector<144x128xbf16>,
    return
  }
  func.func @transform_0(%arg0: i32) -> (i32, i32) {
    %c0_i32 = arith.constant 0 : i32
    %c0_i32_0 = arith.constant 0 : i32
    return %arg0, %c0_i32 : i32, i32
  }
  func.func @transform_1(%arg0: i32) -> (i32, i32) {
    %c0_i32 = arith.constant 0 : i32
    %c0_i32_0 = arith.constant 0 : i32
    %c0_i32_1 = arith.constant 0 : i32
    return %c0_i32, %c0_i32_0 : i32, i32
  }
  func.func @transform_2(%arg0: i32) -> (i32, i32) {
    %c0_i32 = arith.constant 0 : i32
    %c0_i32_0 = arith.constant 0 : i32
    %c0_i32_1 = arith.constant 0 : i32
    return %c0_i32, %c0_i32_0 : i32, i32
  }
  func.func @transform_3(%arg0: i32) -> (i32, i32) {
    %c0_i32 = arith.constant 0 : i32
    %c0_i32_0 = arith.constant 0 : i32
    return %arg0, %c0_i32 : i32, i32
  }
}

module attributes {stable_mosaic.version = 11 : i64} {
  func.func @_conv2_kernel(%arg0: i32, %arg1: memref<32x1600xbf16, #tpu.memory_space<vmem>>, %arg2: memref<1600x128xbf16, #tpu.memory_space<vmem>>, %arg3: memref<1x128xf32, #tpu.memory_space<vmem>>, %arg4: memref<32x128xf32, #tpu.memory_space<vmem>>, %arg5: memref<1x2x128xf32, #tpu.memory_space<vmem>>) attributes {dimension_semantics = [#tpu.dimension_semantics<parallel>], iteration_bounds = array<i64: 1>, scalar_prefetch = 0 : i64, scratch_operands = 0 : i64, tpu.core_type = #tpu.core_type<tc>, window_params = [{transform_indices = @transform_0, window_bounds = array<i64: 32, 1600>}, {pipeline_mode = #tpu.pipeline_mode<synchronous>, transform_indices = @transform_1, window_bounds = array<i64: 1600, 128>}, {pipeline_mode = #tpu.pipeline_mode<synchronous>, transform_indices = @transform_2, window_bounds = array<i64: 1, 128>}, {transform_indices = @transform_3, window_bounds = array<i64: 32, 128>}, {transform_indices = @transform_4, window_bounds = array<i64: 1, 2, 128>}]} {
    %c0 = arith.constant 0 : index
    %c0_0 = arith.constant 0 : index
    %0 = vector.load %arg1[%c0, %c0_0] : memref<32x1600xbf16, #tpu.memory_space<vmem>>, vector<32x1600xbf16>
    %c0_1 = arith.constant 0 : index
    %c0_2 = arith.constant 0 : index
    %1 = vector.load %arg2[%c0_1, %c0_2] : memref<1600x128xbf16, #tpu.memory_space<vmem>>, vector<1600x128xbf16>
    %cst = arith.constant dense<0.000000e+00> : vector<32x128xf32>
    %2 = tpu.matmul %0, %1, %cst {dimension_numbers = #tpu.dot_dimension_numbers<[1], [0], [0], [1], [0, 0, 1, 1], [], []>} : vector<32x1600xbf16>, vector<1600x128xbf16>, vector<32x128xf32> -> vector<32x128xf32>
    %c0_3 = arith.constant 0 : index
    %c0_4 = arith.constant 0 : index
    %3 = vector.load %arg3[%c0_3, %c0_4] : memref<1x128xf32, #tpu.memory_space<vmem>>, vector<1x128xf32>
    %4 = vector.broadcast %3 : vector<1x128xf32> to vector<32x128xf32>
    %5 = arith.addf %2, %4 : vector<32x128xf32>
    %c0_5 = arith.constant 0 : index
    %c0_6 = arith.constant 0 : index
    %6 = vector.load %arg4[%c0_5, %c0_6] : memref<32x128xf32, #tpu.memory_space<vmem>>, vector<32x128xf32>
    tpu.vector_store %arg4[%c0_5, %c0_6], %5 {strides = array<i32>} : memref<32x128xf32, #tpu.memory_space<vmem>>, vector<32x128xf32>,
    %cst_7 = arith.constant dense<0.000000e+00> : vector<128xf32>
    %7 = vector.multi_reduction <add>, %5, %cst_7 [0] : vector<32x128xf32> to vector<128xf32>
    %8 = vector.shape_cast %7 : vector<128xf32> to vector<1x128xf32>
    %9 = arith.mulf %5, %5 : vector<32x128xf32>
    %cst_8 = arith.constant dense<0.000000e+00> : vector<128xf32>
    %10 = vector.multi_reduction <add>, %9, %cst_8 [0] : vector<32x128xf32> to vector<128xf32>
    %11 = vector.shape_cast %10 : vector<128xf32> to vector<1x128xf32>
    %12 = tpu.concatenate %8, %11 in 0 : vector<1x128xf32>, vector<1x128xf32> -> vector<2x128xf32>
    %13 = vector.shape_cast %12 : vector<2x128xf32> to vector<1x2x128xf32>
    %c0_9 = arith.constant 0 : index
    %c0_10 = arith.constant 0 : index
    %c0_11 = arith.constant 0 : index
    %14 = vector.load %arg5[%c0_9, %c0_10, %c0_11] : memref<1x2x128xf32, #tpu.memory_space<vmem>>, vector<1x2x128xf32>
    tpu.vector_store %arg5[%c0_9, %c0_10, %c0_11], %13 {strides = array<i32>} : memref<1x2x128xf32, #tpu.memory_space<vmem>>, vector<1x2x128xf32>,
    return
  }
  func.func @transform_0(%arg0: i32) -> (i32, i32) {
    %c0_i32 = arith.constant 0 : i32
    %c0_i32_0 = arith.constant 0 : i32
    return %arg0, %c0_i32 : i32, i32
  }
  func.func @transform_1(%arg0: i32) -> (i32, i32) {
    %c0_i32 = arith.constant 0 : i32
    %c0_i32_0 = arith.constant 0 : i32
    %c0_i32_1 = arith.constant 0 : i32
    return %c0_i32, %c0_i32_0 : i32, i32
  }
  func.func @transform_2(%arg0: i32) -> (i32, i32) {
    %c0_i32 = arith.constant 0 : i32
    %c0_i32_0 = arith.constant 0 : i32
    %c0_i32_1 = arith.constant 0 : i32
    return %c0_i32, %c0_i32_0 : i32, i32
  }
  func.func @transform_3(%arg0: i32) -> (i32, i32) {
    %c0_i32 = arith.constant 0 : i32
    %c0_i32_0 = arith.constant 0 : i32
    return %arg0, %c0_i32 : i32, i32
  }
  func.func @transform_4(%arg0: i32) -> (i32, i32, i32) {
    %c0_i32 = arith.constant 0 : i32
    %c0_i32_0 = arith.constant 0 : i32
    %c0_i32_1 = arith.constant 0 : i32
    return %arg0, %c0_i32, %c0_i32_0 : i32, i32, i32
  }
}

module attributes {stable_mosaic.version = 11 : i64} {
  func.func @_head_kernel(%arg0: i32, %arg1: memref<2x2048xf32, #tpu.memory_space<vmem>>, %arg2: memref<1x2048xf32, #tpu.memory_space<vmem>>, %arg3: memref<1x2048xf32, #tpu.memory_space<vmem>>, %arg4: memref<2048x64xbf16, #tpu.memory_space<vmem>>, %arg5: memref<1x64xf32, #tpu.memory_space<vmem>>, %arg6: memref<1x64xf32, #tpu.memory_space<vmem>>, %arg7: memref<1x1xf32, #tpu.memory_space<vmem>>, %arg8: memref<2x1xf32, #tpu.memory_space<vmem>>) attributes {dimension_semantics = [#tpu.dimension_semantics<parallel>], iteration_bounds = array<i64: 1>, scalar_prefetch = 0 : i64, scratch_operands = 0 : i64, tpu.core_type = #tpu.core_type<tc>, window_params = [{transform_indices = @transform_0, window_bounds = array<i64: 2, 2048>}, {pipeline_mode = #tpu.pipeline_mode<synchronous>, transform_indices = @transform_1, window_bounds = array<i64: 1, 2048>}, {pipeline_mode = #tpu.pipeline_mode<synchronous>, transform_indices = @transform_2, window_bounds = array<i64: 1, 2048>}, {pipeline_mode = #tpu.pipeline_mode<synchronous>, transform_indices = @transform_3, window_bounds = array<i64: 2048, 64>}, {pipeline_mode = #tpu.pipeline_mode<synchronous>, transform_indices = @transform_4, window_bounds = array<i64: 1, 64>}, {pipeline_mode = #tpu.pipeline_mode<synchronous>, transform_indices = @transform_5, window_bounds = array<i64: 1, 64>}, {pipeline_mode = #tpu.pipeline_mode<synchronous>, transform_indices = @transform_6, window_bounds = array<i64: 1, 1>}, {transform_indices = @transform_7, window_bounds = array<i64: 2, 1>}]} {
    %c0 = arith.constant 0 : index
    %c0_0 = arith.constant 0 : index
    %0 = vector.load %arg1[%c0, %c0_0] : memref<2x2048xf32, #tpu.memory_space<vmem>>, vector<2x2048xf32>
    %c0_1 = arith.constant 0 : index
    %c0_2 = arith.constant 0 : index
    %1 = vector.load %arg2[%c0_1, %c0_2] : memref<1x2048xf32, #tpu.memory_space<vmem>>, vector<1x2048xf32>
    %2 = vector.broadcast %1 : vector<1x2048xf32> to vector<2x2048xf32>
    %3 = arith.mulf %0, %2 : vector<2x2048xf32>
    %c0_3 = arith.constant 0 : index
    %c0_4 = arith.constant 0 : index
    %4 = vector.load %arg3[%c0_3, %c0_4] : memref<1x2048xf32, #tpu.memory_space<vmem>>, vector<1x2048xf32>
    %5 = vector.broadcast %4 : vector<1x2048xf32> to vector<2x2048xf32>
    %6 = arith.addf %3, %5 : vector<2x2048xf32>
    %7 = arith.truncf %6 : vector<2x2048xf32> to vector<2x2048xbf16>
    %c0_5 = arith.constant 0 : index
    %c0_6 = arith.constant 0 : index
    %8 = vector.load %arg4[%c0_5, %c0_6] : memref<2048x64xbf16, #tpu.memory_space<vmem>>, vector<2048x64xbf16>
    %cst = arith.constant dense<0.000000e+00> : vector<2x64xf32>
    %9 = tpu.matmul %7, %8, %cst {dimension_numbers = #tpu.dot_dimension_numbers<[1], [0], [0], [1], [0, 0, 1, 1], [], []>} : vector<2x2048xbf16>, vector<2048x64xbf16>, vector<2x64xf32> -> vector<2x64xf32>
    %c0_7 = arith.constant 0 : index
    %c0_8 = arith.constant 0 : index
    %10 = vector.load %arg5[%c0_7, %c0_8] : memref<1x64xf32, #tpu.memory_space<vmem>>, vector<1x64xf32>
    %11 = vector.broadcast %10 : vector<1x64xf32> to vector<2x64xf32>
    %12 = arith.addf %9, %11 : vector<2x64xf32>
    %cst_9 = arith.constant 0.000000e+00 : f32
    %13 = vector.broadcast %cst_9 : f32 to vector<2x64xf32>
    %14 = arith.cmpf oge, %12, %13 : vector<2x64xf32>
    %cst_10 = arith.constant 2.000000e-01 : f32
    %15 = vector.broadcast %cst_10 : f32 to vector<2x64xf32>
    %16 = arith.mulf %15, %12 : vector<2x64xf32>
    %17 = arith.select %14, %12, %16 : vector<2x64xi1>, vector<2x64xf32>
    %c0_11 = arith.constant 0 : index
    %c0_12 = arith.constant 0 : index
    %18 = vector.load %arg6[%c0_11, %c0_12] : memref<1x64xf32, #tpu.memory_space<vmem>>, vector<1x64xf32>
    %19 = vector.broadcast %18 : vector<1x64xf32> to vector<2x64xf32>
    %20 = arith.mulf %17, %19 : vector<2x64xf32>
    %cst_13 = arith.constant dense<0.000000e+00> : vector<2xf32>
    %21 = vector.multi_reduction <add>, %20, %cst_13 [1] : vector<2x64xf32> to vector<2xf32>
    %22 = vector.shape_cast %21 : vector<2xf32> to vector<2x1xf32>
    %c0_14 = arith.constant 0 : index
    %c0_15 = arith.constant 0 : index
    %23 = vector.load %arg7[%c0_14, %c0_15] : memref<1x1xf32, #tpu.memory_space<vmem>>, vector<1x1xf32>
    %24 = vector.broadcast %23 : vector<1x1xf32> to vector<2x1xf32>
    %25 = arith.addf %22, %24 : vector<2x1xf32>
    %c0_16 = arith.constant 0 : index
    %c0_17 = arith.constant 0 : index
    %26 = vector.load %arg8[%c0_16, %c0_17] : memref<2x1xf32, #tpu.memory_space<vmem>>, vector<2x1xf32>
    tpu.vector_store %arg8[%c0_16, %c0_17], %25 {strides = array<i32>} : memref<2x1xf32, #tpu.memory_space<vmem>>, vector<2x1xf32>,
    return
  }
  func.func @transform_0(%arg0: i32) -> (i32, i32) {
    %c0_i32 = arith.constant 0 : i32
    %c0_i32_0 = arith.constant 0 : i32
    return %arg0, %c0_i32 : i32, i32
  }
  func.func @transform_1(%arg0: i32) -> (i32, i32) {
    %c0_i32 = arith.constant 0 : i32
    %c0_i32_0 = arith.constant 0 : i32
    %c0_i32_1 = arith.constant 0 : i32
    return %c0_i32, %c0_i32_0 : i32, i32
  }
  func.func @transform_2(%arg0: i32) -> (i32, i32) {
    %c0_i32 = arith.constant 0 : i32
    %c0_i32_0 = arith.constant 0 : i32
    %c0_i32_1 = arith.constant 0 : i32
    return %c0_i32, %c0_i32_0 : i32, i32
  }
  func.func @transform_3(%arg0: i32) -> (i32, i32) {
    %c0_i32 = arith.constant 0 : i32
    %c0_i32_0 = arith.constant 0 : i32
    %c0_i32_1 = arith.constant 0 : i32
    return %c0_i32, %c0_i32_0 : i32, i32
  }
  func.func @transform_4(%arg0: i32) -> (i32, i32) {
    %c0_i32 = arith.constant 0 : i32
    %c0_i32_0 = arith.constant 0 : i32
    %c0_i32_1 = arith.constant 0 : i32
    return %c0_i32, %c0_i32_0 : i32, i32
  }
  func.func @transform_5(%arg0: i32) -> (i32, i32) {
    %c0_i32 = arith.constant 0 : i32
    %c0_i32_0 = arith.constant 0 : i32
    %c0_i32_1 = arith.constant 0 : i32
    return %c0_i32, %c0_i32_0 : i32, i32
  }
  func.func @transform_6(%arg0: i32) -> (i32, i32) {
    %c0_i32 = arith.constant 0 : i32
    %c0_i32_0 = arith.constant 0 : i32
    %c0_i32_1 = arith.constant 0 : i32
    return %c0_i32, %c0_i32_0 : i32, i32
  }
  func.func @transform_7(%arg0: i32) -> (i32, i32) {
    %c0_i32 = arith.constant 0 : i32
    %c0_i32_0 = arith.constant 0 : i32
    return %arg0, %c0_i32 : i32, i32
  }
}

</mosaic_0001>

<llo_original>
// kernel: model_d_forward.3
$region0: #{model_d_forward.3}
  #allocation0 [shape = 'u32[]', space=smem, size = 0x4, offset = 0x4, fixed_abs, tag = 'smem constant byte address 0x4 - core index']
  #allocation1 [shape = 'u32[72,128]{1,0:T(1,128)}', space=vmem, size = 0x9000, scoped, tag = 'internal scratch']
  %s0 = inlined_call_operand.vmem [shape: bf16[144,50], index: 0, kind: input, shape index: {}]
  %s1 = inlined_call_operand.vmem [shape: bf16[50,128], index: 1, kind: input, shape index: {}]
  %s2 = inlined_call_operand.vmem [shape: f32[1,128], index: 2, kind: input, shape index: {}]
  %s3 = inlined_call_operand.vmem [shape: bf16[144,128], index: 3, kind: output, shape index: {}]
  %s4 = sld [smem:[#allocation0]]
  $region22: #{model_d_forward.3} parent=0
    _
  %s6 = ssub.s32 1, %s4
  %s7 = scalar_select 0, %s6, %s4
  // Predicated region
  $region2: #{model_d_forward.3} parent=0 // pred_check
    _
  $region3: #{model_d_forward.3} parent=0 // pred_check_branch
    %9 = sbr.rel (0) target = $region5
  $region4: #{model_d_forward.3} parent=0 // pred_region
    _
  $region5: #{model_d_forward.3} parent=0 // pred_fallthru
    _
  // Predicated region
  $region6: #{model_d_forward.3} parent=0 // pred_check
    _
  $region7: #{model_d_forward.3} parent=0 // pred_check_branch
    %11 = sbr.rel (0) target = $region9
  $region8: #{model_d_forward.3} parent=0 // pred_region
    _
  $region9: #{model_d_forward.3} parent=0 // pred_fallthru
    _
  // Predicated region
  $region10: #{model_d_forward.3} parent=0 // pred_check
    _
  $region11: #{model_d_forward.3} parent=0 // pred_check_branch
    %13 = sbr.rel (0) target = $region13
  $region12: #{model_d_forward.3} parent=0 // pred_region
    _
  $region13: #{model_d_forward.3} parent=0 // pred_fallthru
    _
  %v15 = vld [vmem:[%s0] sm:$0xf]
  %v16 = vld [vmem:[%s0 + $0x4] sm:$0xf]
  %v17 = vld [vmem:[%s0 + $0x8] sm:$0xf]
  %v18 = vld [vmem:[%s0 + $0xc] sm:$0xf]
  %v19 = vld [vmem:[%s0 + $0x10] sm:$0xf]
  %v20 = vld [vmem:[%s0 + $0x14] sm:$0xf]
  %v21 = vld [vmem:[%s0 + $0x18] sm:$0xf]
  %v22 = vld [vmem:[%s0 + $0x1c] sm:$0xf]
  %v23 = vld [vmem:[%s0 + $0x20] sm:$0xf]
  %v24 = vld [vmem:[%s0 + $0x24] sm:$0xf]
  %v25 = vld [vmem:[%s0 + $0x28] sm:$0xf]
  %v26 = vld [vmem:[%s0 + $0x2c] sm:$0xf]
  %v27 = vld [vmem:[%s0 + $0x30] sm:$0xf]
  %v28 = vld [vmem:[%s0 + $0x34] sm:$0xf]
  %v29 = vld [vmem:[%s0 + $0x38] sm:$0xf]
  %v30 = vld [vmem:[%s0 + $0x3c] sm:$0xf]
  %v31 = vld [vmem:[%s0 + $0x40] sm:$0xf]
  %v32 = vld [vmem:[%s0 + $0x44] sm:$0xf]
  %v33 = vld [vmem:[%s1] sm:$0xf]
  %v34 = vld [vmem:[%s1 + $0x4] sm:$0xf]
  %v35 = vld [vmem:[%s1 + $0x8] sm:$0xf]
  %v36 = vld [vmem:[%s1 + $0xc] sm:$0xf]
  %v37 = vld [vmem:[%s1 + $0x10] sm:$0xf]
  %v38 = vld [vmem:[%s1 + $0x14] sm:$0xf]
  %v39 = vld [vmem:[%s1 + $0x18] sm:$0x1]
  %v40 = vld [vmem:[%s2] sm:$0x1]
  %v42 = vperm.slane %v40, 0
  %v62 = vunpack.c.l.b16 %v15
  %v63 = vunpack.c.l.b16 %v16
  %v64 = vunpack.c.l.b16 %v17
  %v65 = vunpack.c.l.b16 %v18
  %v66 = vunpack.c.l.b16 %v19
  %v67 = vunpack.c.l.b16 %v20
  %v68 = vunpack.c.l.b16 %v21
  %v69 = vunpack.c.l.b16 %v22
  %v70 = vunpack.c.l.b16 %v23
  %v71 = vunpack.c.l.b16 %v24
  %v72 = vunpack.c.l.b16 %v25
  %v73 = vunpack.c.l.b16 %v26
  %v74 = vunpack.c.l.b16 %v27
  %v75 = vunpack.c.l.b16 %v28
  %v76 = vunpack.c.l.b16 %v29
  %v77 = vunpack.c.l.b16 %v30
  %v78 = vunpack.c.l.b16 %v31
  %v79 = vunpack.c.l.b16 %v32
  %v80 = vpack.c.b16 %v63, %v62
  %v81 = vpack.c.b16 %v65, %v64
  %v82 = vpack.c.b16 %v67, %v66
  %v83 = vpack.c.b16 %v69, %v68
  %v84 = vpack.c.b16 %v71, %v70
  %v85 = vpack.c.b16 %v73, %v72
  %v86 = vpack.c.b16 %v75, %v74
  %v87 = vpack.c.b16 %v77, %v76
  %v88 = vpack.c.b16 %v79, %v78
  %v96 = vunpack.c.l.b16 %v33
  %v97 = vunpack.c.l.b16 %v34
  %v98 = vunpack.c.l.b16 %v35
  %v99 = vunpack.c.l.b16 %v36
  %v100 = vunpack.c.l.b16 %v37
  %v101 = vunpack.c.l.b16 %v38
  %v102 = vunpack.c.l.b16 %v39
  %v103 = vpack.c.b16 %v97, %v96
  %v104 = vpack.c.b16 %v99, %v98
  %v105 = vpack.c.b16 %v101, %v100
  %v106 = vpack.c.b16 %v102, %v102
  %vm110 = vcmask 408576
  %v112 = vsel %vm110, %v80, 0
  %v115 = vsel %vm110, %v81, 0
  %v118 = vsel %vm110, %v82, 0
  %v121 = vsel %vm110, %v83, 0
  %v124 = vsel %vm110, %v84, 0
  %v127 = vsel %vm110, %v85, 0
  %v130 = vsel %vm110, %v86, 0
  %v133 = vsel %vm110, %v87, 0
  %v136 = vsel %vm110, %v88, 0
  %vm138 = vcmask 1040384
  %v140 = vsel %vm138, %v106, 0
  %142 = vmatpush.bf16.msra.mxu0 0
  %143 = vmatpush.bf16.msra.mxu0 0
  %144 = vmatpush.bf16.msra.mxu0 0
  %145 = vmatpush.bf16.msra.mxu0 0
  %146 = vmatpush.bf16.msra.mxu0 %v140
  %147 = vmatpush.bf16.msra.mxu0 %v105
  %148 = vmatpush.bf16.msra.mxu0 %v104
  %149 = vmatpush.bf16.msra.mxu0 %v103
  %150 = vmatmul.bf16.gmra.mxu0 %v112
  %v151 = vpop.f32.mrf.mxu0
  %v152 = vadd.f32 %v42, %v151
  %v153 = vpop.f32.mrf.mxu0
  %v154 = vadd.f32 %v42, %v153
  %155 = vmatmul.bf16.gmra.mxu0 %v115
  %v156 = vpop.f32.mrf.mxu0
  %v157 = vadd.f32 %v42, %v156
  %v158 = vpop.f32.mrf.mxu0
  %v159 = vadd.f32 %v42, %v158
  %160 = vmatmul.bf16.gmra.mxu0 %v118
  %v161 = vpop.f32.mrf.mxu0
  %v162 = vadd.f32 %v42, %v161
  %v163 = vpop.f32.mrf.mxu0
  %v164 = vadd.f32 %v42, %v163
  %165 = vmatmul.bf16.gmra.mxu0 %v121
  %v166 = vpop.f32.mrf.mxu0
  %v167 = vadd.f32 %v42, %v166
  %v168 = vpop.f32.mrf.mxu0
  %v169 = vadd.f32 %v42, %v168
  %170 = vmatmul.bf16.gmra.mxu0 %v124
  %v171 = vpop.f32.mrf.mxu0
  %v172 = vadd.f32 %v42, %v171
  %v173 = vpop.f32.mrf.mxu0
  %v174 = vadd.f32 %v42, %v173
  %175 = vmatmul.bf16.gmra.mxu0 %v127
  %v176 = vpop.f32.mrf.mxu0
  %v177 = vadd.f32 %v42, %v176
  %v178 = vpop.f32.mrf.mxu0
  %v179 = vadd.f32 %v42, %v178
  %180 = vmatmul.bf16.gmra.mxu0 %v130
  %v181 = vpop.f32.mrf.mxu0
  %v182 = vadd.f32 %v42, %v181
  %v183 = vpop.f32.mrf.mxu0
  %v184 = vadd.f32 %v42, %v183
  %185 = vmatmul.bf16.gmra.mxu0 %v133
  %v186 = vpop.f32.mrf.mxu0
  %v187 = vadd.f32 %v42, %v186
  %v188 = vpop.f32.mrf.mxu0
  %v189 = vadd.f32 %v42, %v188
  %190 = vmatmul.bf16.gmra.mxu0 %v136
  %v191 = vpop.f32.mrf.mxu0
  %v192 = vadd.f32 %v42, %v191
  %v193 = vpop.f32.mrf.mxu0
  %v194 = vadd.f32 %v42, %v193
  %195 = vdwg.mxu0
  %vm196 = vcmp.ge.f32.partialorder %v152, 0.0
  %vm197 = vcmp.ge.f32.partialorder %v154, 0.0
  %vm198 = vcmp.ge.f32.partialorder %v157, 0.0
  %vm199 = vcmp.ge.f32.partialorder %v159, 0.0
  %vm200 = vcmp.ge.f32.partialorder %v162, 0.0
  %vm201 = vcmp.ge.f32.partialorder %v164, 0.0
  %vm202 = vcmp.ge.f32.partialorder %v167, 0.0
  %vm203 = vcmp.ge.f32.partialorder %v169, 0.0
  %vm204 = vcmp.ge.f32.partialorder %v172, 0.0
  %vm205 = vcmp.ge.f32.partialorder %v174, 0.0
  %vm206 = vcmp.ge.f32.partialorder %v177, 0.0
  %vm207 = vcmp.ge.f32.partialorder %v179, 0.0
  %vm208 = vcmp.ge.f32.partialorder %v182, 0.0
  %vm209 = vcmp.ge.f32.partialorder %v184, 0.0
  %vm210 = vcmp.ge.f32.partialorder %v187, 0.0
  %vm211 = vcmp.ge.f32.partialorder %v189, 0.0
  %vm212 = vcmp.ge.f32.partialorder %v192, 0.0
  %vm213 = vcmp.ge.f32.partialorder %v194, 0.0
  %v214 = vmul.f32 %v152, 0.2
  %v215 = vmul.f32 %v154, 0.2
  %v216 = vmul.f32 %v157, 0.2
  %v217 = vmul.f32 %v159, 0.2
  %v218 = vmul.f32 %v162, 0.2
  %v219 = vmul.f32 %v164, 0.2
  %v220 = vmul.f32 %v167, 0.2
  %v221 = vmul.f32 %v169, 0.2
  %v222 = vmul.f32 %v172, 0.2
  %v223 = vmul.f32 %v174, 0.2
  %v224 = vmul.f32 %v177, 0.2
  %v225 = vmul.f32 %v179, 0.2
  %v226 = vmul.f32 %v182, 0.2
  %v227 = vmul.f32 %v184, 0.2
  %v228 = vmul.f32 %v187, 0.2
  %v229 = vmul.f32 %v189, 0.2
  %v230 = vmul.f32 %v192, 0.2
  %v231 = vmul.f32 %v194, 0.2
  %v232 = vsel %vm196, %v152, %v214
  %v233 = vsel %vm197, %v154, %v215
  %v234 = vsel %vm198, %v157, %v216
  %v235 = vsel %vm199, %v159, %v217
  %v236 = vsel %vm200, %v162, %v218
  %v237 = vsel %vm201, %v164, %v219
  %v238 = vsel %vm202, %v167, %v220
  %v239 = vsel %vm203, %v169, %v221
  %v240 = vsel %vm204, %v172, %v222
  %v241 = vsel %vm205, %v174, %v223
  %v242 = vsel %vm206, %v177, %v224
  %v243 = vsel %vm207, %v179, %v225
  %v244 = vsel %vm208, %v182, %v226
  %v245 = vsel %vm209, %v184, %v227
  %v246 = vsel %vm210, %v187, %v228
  %v247 = vsel %vm211, %v189, %v229
  %v248 = vsel %vm212, %v192, %v230
  %v249 = vsel %vm213, %v194, %v231
  %v250 = vpack.c.bf16 %v232, %v232
  %v251 = vpack.c.bf16 %v233, %v233
  %v252 = vpack.c.bf16 %v234, %v234
  %v253 = vpack.c.bf16 %v235, %v235
  %v254 = vpack.c.bf16 %v236, %v236
  %v255 = vpack.c.bf16 %v237, %v237
  %v256 = vpack.c.bf16 %v238, %v238
  %v257 = vpack.c.bf16 %v239, %v239
  %v258 = vpack.c.bf16 %v240, %v240
  %v259 = vpack.c.bf16 %v241, %v241
  %v260 = vpack.c.bf16 %v242, %v242
  %v261 = vpack.c.bf16 %v243, %v243
  %v262 = vpack.c.bf16 %v244, %v244
  %v263 = vpack.c.bf16 %v245, %v245
  %v264 = vpack.c.bf16 %v246, %v246
  %v265 = vpack.c.bf16 %v247, %v247
  %v266 = vpack.c.bf16 %v248, %v248
  %v267 = vpack.c.bf16 %v249, %v249
  %268 = vst [vmem:[%s3] sm:$0xf] %v250
  %269 = vst [vmem:[%s3 + $0x4] sm:$0xf] %v251
  %270 = vst [vmem:[%s3 + $0x8] sm:$0xf] %v252
  %271 = vst [vmem:[%s3 + $0xc] sm:$0xf] %v253
  %272 = vst [vmem:[%s3 + $0x10] sm:$0xf] %v254
  %273 = vst [vmem:[%s3 + $0x14] sm:$0xf] %v255
  %274 = vst [vmem:[%s3 + $0x18] sm:$0xf] %v256
  %275 = vst [vmem:[%s3 + $0x1c] sm:$0xf] %v257
  %276 = vst [vmem:[%s3 + $0x20] sm:$0xf] %v258
  %277 = vst [vmem:[%s3 + $0x24] sm:$0xf] %v259
  %278 = vst [vmem:[%s3 + $0x28] sm:$0xf] %v260
  %279 = vst [vmem:[%s3 + $0x2c] sm:$0xf] %v261
  %280 = vst [vmem:[%s3 + $0x30] sm:$0xf] %v262
  %281 = vst [vmem:[%s3 + $0x34] sm:$0xf] %v263
  %282 = vst [vmem:[%s3 + $0x38] sm:$0xf] %v264
  %283 = vst [vmem:[%s3 + $0x3c] sm:$0xf] %v265
  %284 = vst [vmem:[%s3 + $0x40] sm:$0xf] %v266
  %285 = vst [vmem:[%s3 + $0x44] sm:$0xf] %v267
  // Predicated region
  $region14: #{model_d_forward.3} parent=0 // pred_check
    _
  $region15: #{model_d_forward.3} parent=0 // pred_check_branch
    %287 = sbr.rel (0) target = $region17
  $region16: #{model_d_forward.3} parent=0 // pred_region
    _
  $region17: #{model_d_forward.3} parent=0 // pred_fallthru
    _
  // Predicated region
  $region18: #{model_d_forward.3} parent=0 // pred_check
    _
  $region19: #{model_d_forward.3} parent=0 // pred_check_branch
    %289 = sbr.rel (0) target = $region21
  $region20: #{model_d_forward.3} parent=0 // pred_region
    _
  $region21: #{model_d_forward.3} parent=0 // pred_fallthru
    _

// kernel: tile.13
$region0: #{tile.13}
  #allocation0 [shape = 's32[1]{0}', space=sflag, size = 0x4, scoped, tag = 'scoped memory for tile.13']
  %s0 = inlined_call_operand.vmem [shape: f32[128], index: 0, kind: input, shape index: {}]
  %s1 = inlined_call_operand.vmem [shape: f32[16,128], index: 1, kind: output, shape index: {}]
  // Predicated region
  $region2: #{tile.13} parent=0 // pred_check
    _
  $region3: #{tile.13} parent=0 // pred_check_branch
    %3 = sbr.rel (0) target = $region5
  $region4: #{tile.13} parent=0 // pred_region
    _
  $region5: #{tile.13} parent=0 // pred_fallthru
    _
  %v4 = vld [vmem:[%s0] ss:$0 sm:$0xff]
  %5 = vst [vmem:[%s1] sm:$0xff] %v4
  %s6 = scalar_lea.vmem %s1, 8
  %7 = vst [vmem:[%s6] sm:$0xff] %v4

// kernel: model_d_forward.4
$region0: #{model_d_forward.4}
  #allocation0 [shape = 'u32[]', space=smem, size = 0x4, offset = 0x4, fixed_abs, tag = 'smem constant byte address 0x4 - core index']
  #allocation1 [shape = 'u32[72,128]{1,0:T(1,128)}', space=vmem, size = 0x9000, scoped, tag = 'internal scratch']
  %s0 = inlined_call_operand.vmem [shape: bf16[32,1600], index: 0, kind: input, shape index: {}]
  %s1 = inlined_call_operand.vmem [shape: bf16[1600,128], index: 1, kind: input, shape index: {}]
  %s2 = inlined_call_operand.vmem [shape: f32[1,128], index: 2, kind: input, shape index: {}]
  %s3 = inlined_call_operand.vmem [shape: f32[32,128], index: 3, kind: output, shape index: {0}]
  %s4 = inlined_call_operand.vmem [shape: f32[1,2,128], index: 4, kind: output, shape index: {1}]
  %5 = xla_tuple %s3, %s4
  %s6 = sld [smem:[#allocation0]]
  $region30: #{model_d_forward.4} parent=0
    _
  %s8 = ssub.s32 1, %s6
  %s9 = scalar_select 0, %s8, %s6
  // Predicated region
  $region2: #{model_d_forward.4} parent=0 // pred_check
    _
  $region3: #{model_d_forward.4} parent=0 // pred_check_branch
    %11 = sbr.rel (0) target = $region5
  $region4: #{model_d_forward.4} parent=0 // pred_region
    _
  $region5: #{model_d_forward.4} parent=0 // pred_fallthru
    _
  // Predicated region
  $region6: #{model_d_forward.4} parent=0 // pred_check
    _
  $region7: #{model_d_forward.4} parent=0 // pred_check_branch
    %13 = sbr.rel (0) target = $region9
  $region8: #{model_d_forward.4} parent=0 // pred_region
    _
  $region9: #{model_d_forward.4} parent=0 // pred_fallthru
    _
  // Predicated region
  $region10: #{model_d_forward.4} parent=0 // pred_check
    _
  $region11: #{model_d_forward.4} parent=0 // pred_check_branch
    %15 = sbr.rel (0) target = $region13
  $region12: #{model_d_forward.4} parent=0 // pred_region
    _
  $region13: #{model_d_forward.4} parent=0 // pred_fallthru
    _
  %v17 = vld [vmem:[%s0] sm:$0xff]
  %v18 = vld [vmem:[%s0 + $0x8] sm:$0xff]
  %v19 = vld [vmem:[%s0 + $0x10] sm:$0xff]
  %v20 = vld [vmem:[%s0 + $0x18] sm:$0xff]
  %v21 = vld [vmem:[%s0 + $0x20] sm:$0xff]
  %v22 = vld [vmem:[%s0 + $0x28] sm:$0xff]
  %v23 = vld [vmem:[%s0 + $0x30] sm:$0xf]
  %v24 = vld [vmem:[%s0 + $0x34] sm:$0xff]
  %v25 = vld [vmem:[%s0 + $0x3c] sm:$0xff]
  %v26 = vld [vmem:[%s0 + $0x44] sm:$0xff]
  %v27 = vld [vmem:[%s0 + $0x4c] sm:$0xff]
  %v28 = vld [vmem:[%s0 + $0x54] sm:$0xff]
  %v29 = vld [vmem:[%s0 + $0x5c] sm:$0xff]
  %v30 = vld [vmem:[%s0 + $0x64] sm:$0xf]
  %v31 = vld [vmem:[%s0 + $0x68] sm:$0xff]
  %v32 = vld [vmem:[%s0 + $0x70] sm:$0xff]
  %v33 = vld [vmem:[%s0 + $0x78] sm:$0xff]
  %v34 = vld [vmem:[%s0 + $0x80] sm:$0xff]
  %v35 = vld [vmem:[%s0 + $0x88] sm:$0xff]
  %v36 = vld [vmem:[%s0 + $0x90] sm:$0xff]
  %v37 = vld [vmem:[%s0 + $0x98] sm:$0xf]
  %v38 = vld [vmem:[%s0 + $0x9c] sm:$0xff]
  %v39 = vld [vmem:[%s0 + $0xa4] sm:$0xff]
  %v40 = vld [vmem:[%s0 + $0xac] sm:$0xff]
  %v41 = vld [vmem:[%s0 + $0xb4] sm:$0xff]
  %v42 = vld [vmem:[%s0 + $0xbc] sm:$0xff]
  %v43 = vld [vmem:[%s0 + $0xc4] sm:$0xff]
  %v44 = vld [vmem:[%s0 + $0xcc] sm:$0xf]
  %v45 = vld [vmem:[%s1] sm:$0xf]
  %v46 = vld [vmem:[%s1 + $0x4] sm:$0xf]
  %v47 = vld [vmem:[%s1 + $0x8] sm:$0xf]
  %v48 = vld [vmem:[%s1 + $0xc] sm:$0xf]
  %v49 = vld [vmem:[%s1 + $0x10] sm:$0xf]
  %v50 = vld [vmem:[%s1 + $0x14] sm:$0xf]
  %v51 = vld [vmem:[%s1 + $0x18] sm:$0xf]
  %v52 = vld [vmem:[%s1 + $0x1c] sm:$0xf]
  %v53 = vld [vmem:[%s1 + $0x20] sm:$0xf]
  %v54 = vld [vmem:[%s1 + $0x24] sm:$0xf]
  %v55 = vld [vmem:[%s1 + $0x28] sm:$0xf]
  %v56 = vld [vmem:[%s1 + $0x2c] sm:$0xf]
  %v57 = vld [vmem:[%s1 + $0x30] sm:$0xf]
  %v58 = vld [vmem:[%s1 + $0x34] sm:$0xf]
  %v59 = vld [vmem:[%s1 + $0x38] sm:$0xf]
  %v60 = vld [vmem:[%s1 + $0x3c] sm:$0xf]
  %v61 = vld [vmem:[%s1 + $0x40] sm:$0xf]
  %v62 = vld [vmem:[%s1 + $0x44] sm:$0xf]
  %v63 = vld [vmem:[%s1 + $0x48] sm:$0xf]
  %v64 = vld [vmem:[%s1 + $0x4c] sm:$0xf]
  %v65 = vld [vmem:[%s1 + $0x50] sm:$0xf]
  %v66 = vld [vmem:[%s1 + $0x54] sm:$0xf]
  %v67 = vld [vmem:[%s1 + $0x58] sm:$0xf]
  %v68 = vld [vmem:[%s1 + $0x5c] sm:$0xf]
  %v69 = vld [vmem:[%s1 + $0x60] sm:$0xf]
  %v70 = vld [vmem:[%s1 + $0x64] sm:$0xf]
  %v71 = vld [vmem:[%s1 + $0x68] sm:$0xf]
  %v72 = vld [vmem:[%s1 + $0x6c] sm:$0xf]
  %v73 = vld [vmem:[%s1 + $0x70] sm:$0xf]
  %v74 = vld [vmem:[%s1 + $0x74] sm:$0xf]
  %v75 = vld [vmem:[%s1 + $0x78] sm:$0xf]
  %v76 = vld [vmem:[%s1 + $0x7c] sm:$0xf]
  %v77 = vld [vmem:[%s1 + $0x80] sm:$0xf]
  %v78 = vld [vmem:[%s1 + $0x84] sm:$0xf]
  %v79 = vld [vmem:[%s1 + $0x88] sm:$0xf]
  %v80 = vld [vmem:[%s1 + $0x8c] sm:$0xf]
  %v81 = vld [vmem:[%s1 + $0x90] sm:$0xf]
  %v82 = vld [vmem:[%s1 + $0x94] sm:$0xf]
  %v83 = vld [vmem:[%s1 + $0x98] sm:$0xf]
  %v84 = vld [vmem:[%s1 + $0x9c] sm:$0xf]
  %v85 = vld [vmem:[%s1 + $0xa0] sm:$0xf]
  %v86 = vld [vmem:[%s1 + $0xa4] sm:$0xf]
  %v87 = vld [vmem:[%s1 + $0xa8] sm:$0xf]
  %v88 = vld [vmem:[%s1 + $0xac] sm:$0xf]
  %v89 = vld [vmem:[%s1 + $0xb0] sm:$0xf]
  %v90 = vld [vmem:[%s1 + $0xb4] sm:$0xf]
  %v91 = vld [vmem:[%s1 + $0xb8] sm:$0xf]
  %v92 = vld [vmem:[%s1 + $0xbc] sm:$0xf]
  %v93 = vld [vmem:[%s1 + $0xc0] sm:$0xf]
  %v94 = vld [vmem:[%s1 + $0xc4] sm:$0xf]
  %v95 = vld [vmem:[%s1 + $0xc8] sm:$0xf]
  %v96 = vld [vmem:[%s1 + $0xcc] sm:$0xf]
  %v97 = vld [vmem:[%s1 + $0xd0] sm:$0xf]
  %v98 = vld [vmem:[%s1 + $0xd4] sm:$0xf]
  %v99 = vld [vmem:[%s1 + $0xd8] sm:$0xf]
  %v100 = vld [vmem:[%s1 + $0xdc] sm:$0xf]
  %v101 = vld [vmem:[%s1 + $0xe0] sm:$0xf]
  %v102 = vld [vmem:[%s1 + $0xe4] sm:$0xf]
  %v103 = vld [vmem:[%s1 + $0xe8] sm:$0xf]
  %v104 = vld [vmem:[%s1 + $0xec] sm:$0xf]
  %v105 = vld [vmem:[%s1 + $0xf0] sm:$0xf]
  %v106 = vld [vmem:[%s1 + $0xf4] sm:$0xf]
  %v107 = vld [vmem:[%s1 + $0xf8] sm:$0xf]
  %v108 = vld [vmem:[%s1 + $0xfc] sm:$0xf]
  %v109 = vld [vmem:[%s1 + $0x100] sm:$0xf]
  %v110 = vld [vmem:[%s1 + $0x104] sm:$0xf]
  %v111 = vld [vmem:[%s1 + $0x108] sm:$0xf]
  %v112 = vld [vmem:[%s1 + $0x10c] sm:$0xf]
  %v113 = vld [vmem:[%s1 + $0x110] sm:$0xf]
  %v114 = vld [vmem:[%s1 + $0x114] sm:$0xf]
  %v115 = vld [vmem:[%s1 + $0x118] sm:$0xf]
  %v116 = vld [vmem:[%s1 + $0x11c] sm:$0xf]
  %v117 = vld [vmem:[%s1 + $0x120] sm:$0xf]
  %v118 = vld [vmem:[%s1 + $0x124] sm:$0xf]
  %v119 = vld [vmem:[%s1 + $0x128] sm:$0xf]
  %v120 = vld [vmem:[%s1 + $0x12c] sm:$0xf]
  %v121 = vld [vmem:[%s1 + $0x130] sm:$0xf]
  %v122 = vld [vmem:[%s1 + $0x134] sm:$0xf]
  %v123 = vld [vmem:[%s1 + $0x138] sm:$0xf]
  %v124 = vld [vmem:[%s1 + $0x13c] sm:$0xf]
  %v125 = vld [vmem:[%s1 + $0x140] sm:$0xf]
  %v126 = vld [vmem:[%s1 + $0x144] sm:$0xf]
  %v127 = vld [vmem:[%s1 + $0x148] sm:$0xf]
  %v128 = vld [vmem:[%s1 + $0x14c] sm:$0xf]
  %v129 = vld [vmem:[%s1 + $0x150] sm:$0xf]
  %v130 = vld [vmem:[%s1 + $0x154] sm:$0xf]
  %v131 = vld [vmem:[%s1 + $0x158] sm:$0xf]
  %v132 = vld [vmem:[%s1 + $0x15c] sm:$0xf]
  %v133 = vld [vmem:[%s1 + $0x160] sm:$0xf]
  %v134 = vld [vmem:[%s1 + $0x164] sm:$0xf]
  %v135 = vld [vmem:[%s1 + $0x168] sm:$0xf]
  %v136 = vld [vmem:[%s1 + $0x16c] sm:$0xf]
  %v137 = vld [vmem:[%s1 + $0x170] sm:$0xf]
  %v138 = vld [vmem:[%s1 + $0x174] sm:$0xf]
  %v139 = vld [vmem:[%s1 + $0x178] sm:$0xf]
  %v140 = vld [vmem:[%s1 + $0x17c] sm:$0xf]
  %v141 = vld [vmem:[%s1 + $0x180] sm:$0xf]
  %v142 = vld [vmem:[%s1 + $0x184] sm:$0xf]
  %v143 = vld [vmem:[%s1 + $0x188] sm:$0xf]
  %v144 = vld [vmem:[%s1 + $0x18c] sm:$0xf]
  %v145 = vld [vmem:[%s1 + $0x190] sm:$0xf]
  %v146 = vld [vmem:[%s1 + $0x194] sm:$0xf]
  %v147 = vld [vmem:[%s1 + $0x198] sm:$0xf]
  %v148 = vld [vmem:[%s1 + $0x19c] sm:$0xf]
  %v149 = vld [vmem:[%s1 + $0x1a0] sm:$0xf]
  %v150 = vld [vmem:[%s1 + $0x1a4] sm:$0xf]
  %v151 = vld [vmem:[%s1 + $0x1a8] sm:$0xf]
  %v152 = vld [vmem:[%s1 + $0x1ac] sm:$0xf]
  %v153 = vld [vmem:[%s1 + $0x1b0] sm:$0xf]
  %v154 = vld [vmem:[%s1 + $0x1b4] sm:$0xf]
  %v155 = vld [vmem:[%s1 + $0x1b8] sm:$0xf]
  %v156 = vld [vmem:[%s1 + $0x1bc] sm:$0xf]
  %v157 = vld [vmem:[%s1 + $0x1c0] sm:$0xf]
  %v158 = vld [vmem:[%s1 + $0x1c4] sm:$0xf]
  %v159 = vld [vmem:[%s1 + $0x1c8] sm:$0xf]
  %v160 = vld [vmem:[%s1 + $0x1cc] sm:$0xf]
  %v161 = vld [vmem:[%s1 + $0x1d0] sm:$0xf]
  %v162 = vld [vmem:[%s1 + $0x1d4] sm:$0xf]
  %v163 = vld [vmem:[%s1 + $0x1d8] sm:$0xf]
  %v164 = vld [vmem:[%s1 + $0x1dc] sm:$0xf]
  %v165 = vld [vmem:[%s1 + $0x1e0] sm:$0xf]
  %v166 = vld [vmem:[%s1 + $0x1e4] sm:$0xf]
  %v167 = vld [vmem:[%s1 + $0x1e8] sm:$0xf]
  %v168 = vld [vmem:[%s1 + $0x1ec] sm:$0xf]
  %v169 = vld [vmem:[%s1 + $0x1f0] sm:$0xf]
  %v170 = vld [vmem:[%s1 + $0x1f4] sm:$0xf]
  %v171 = vld [vmem:[%s1 + $0x1f8] sm:$0xf]
  %v172 = vld [vmem:[%s1 + $0x1fc] sm:$0xf]
  %v173 = vld [vmem:[%s1 + $0x200] sm:$0xf]
  %v174 = vld [vmem:[%s1 + $0x204] sm:$0xf]
  %v175 = vld [vmem:[%s1 + $0x208] sm:$0xf]
  %v176 = vld [vmem:[%s1 + $0x20c] sm:$0xf]
  %v177 = vld [vmem:[%s1 + $0x210] sm:$0xf]
  %v178 = vld [vmem:[%s1 + $0x214] sm:$0xf]
  %v179 = vld [vmem:[%s1 + $0x218] sm:$0xf]
  %v180 = vld [vmem:[%s1 + $0x21c] sm:$0xf]
  %v181 = vld [vmem:[%s1 + $0x220] sm:$0xf]
  %v182 = vld [vmem:[%s1 + $0x224] sm:$0xf]
  %v183 = vld [vmem:[%s1 + $0x228] sm:$0xf]
  %v184 = vld [vmem:[%s1 + $0x22c] sm:$0xf]
  %v185 = vld [vmem:[%s1 + $0x230] sm:$0xf]
  %v186 = vld [vmem:[%s1 + $0x234] sm:$0xf]
  %v187 = vld [vmem:[%s1 + $0x238] sm:$0xf]
  %v188 = vld [vmem:[%s1 + $0x23c] sm:$0xf]
  %v189 = vld [vmem:[%s1 + $0x240] sm:$0xf]
  %v190 = vld [vmem:[%s1 + $0x244] sm:$0xf]
  %v191 = vld [vmem:[%s1 + $0x248] sm:$0xf]
  %v192 = vld [vmem:[%s1 + $0x24c] sm:$0xf]
  %v193 = vld [vmem:[%s1 + $0x250] sm:$0xf]
  %v194 = vld [vmem:[%s1 + $0x254] sm:$0xf]
  %v195 = vld [vmem:[%s1 + $0x258] sm:$0xf]
  %v196 = vld [vmem:[%s1 + $0x25c] sm:$0xf]
  %v197 = vld [vmem:[%s1 + $0x260] sm:$0xf]
  %v198 = vld [vmem:[%s1 + $0x264] sm:$0xf]
  %v199 = vld [vmem:[%s1 + $0x268] sm:$0xf]
  %v200 = vld [vmem:[%s1 + $0x26c] sm:$0xf]
  %v201 = vld [vmem:[%s1 + $0x270] sm:$0xf]
  %v202 = vld [vmem:[%s1 + $0x274] sm:$0xf]
  %v203 = vld [vmem:[%s1 + $0x278] sm:$0xf]
  %v204 = vld [vmem:[%s1 + $0x27c] sm:$0xf]
  %v205 = vld [vmem:[%s1 + $0x280] sm:$0xf]
  %v206 = vld [vmem:[%s1 + $0x284] sm:$0xf]
  %v207 = vld [vmem:[%s1 + $0x288] sm:$0xf]
  %v208 = vld [vmem:[%s1 + $0x28c] sm:$0xf]
  %v209 = vld [vmem:[%s1 + $0x290] sm:$0xf]
  %v210 = vld [vmem:[%s1 + $0x294] sm:$0xf]
  %v211 = vld [vmem:[%s1 + $0x298] sm:$0xf]
  %v212 = vld [vmem:[%s1 + $0x29c] sm:$0xf]
  %v213 = vld [vmem:[%s1 + $0x2a0] sm:$0xf]
  %v214 = vld [vmem:[%s1 + $0x2a4] sm:$0xf]
  %v215 = vld [vmem:[%s1 + $0x2a8] sm:$0xf]
  %v216 = vld [vmem:[%s1 + $0x2ac] sm:$0xf]
  %v217 = vld [vmem:[%s1 + $0x2b0] sm:$0xf]
  %v218 = vld [vmem:[%s1 + $0x2b4] sm:$0xf]
  %v219 = vld [vmem:[%s1 + $0x2b8] sm:$0xf]
  %v220 = vld [vmem:[%s1 + $0x2bc] sm:$0xf]
  %v221 = vld [vmem:[%s1 + $0x2c0] sm:$0xf]
  %v222 = vld [vmem:[%s1 + $0x2c4] sm:$0xf]
  %v223 = vld [vmem:[%s1 + $0x2c8] sm:$0xf]
  %v224 = vld [vmem:[%s1 + $0x2cc] sm:$0xf]
  %v225 = vld [vmem:[%s1 + $0x2d0] sm:$0xf]
  %v226 = vld [vmem:[%s1 + $0x2d4] sm:$0xf]
  %v227 = vld [vmem:[%s1 + $0x2d8] sm:$0xf]
  %v228 = vld [vmem:[%s1 + $0x2dc] sm:$0xf]
  %v229 = vld [vmem:[%s1 + $0x2e0] sm:$0xf]
  %v230 = vld [vmem:[%s1 + $0x2e4] sm:$0xf]
  %v231 = vld [vmem:[%s1 + $0x2e8] sm:$0xf]
  %v232 = vld [vmem:[%s1 + $0x2ec] sm:$0xf]
  %v233 = vld [vmem:[%s1 + $0x2f0] sm:$0xf]
  %v234 = vld [vmem:[%s1 + $0x2f4] sm:$0xf]
  %v235 = vld [vmem:[%s1 + $0x2f8] sm:$0xf]
  %v236 = vld [vmem:[%s1 + $0x2fc] sm:$0xf]
  %v237 = vld [vmem:[%s1 + $0x300] sm:$0xf]
  %v238 = vld [vmem:[%s1 + $0x304] sm:$0xf]
  %v239 = vld [vmem:[%s1 + $0x308] sm:$0xf]
  %v240 = vld [vmem:[%s1 + $0x30c] sm:$0xf]
  %v241 = vld [vmem:[%s1 + $0x310] sm:$0xf]
  %v242 = vld [vmem:[%s1 + $0x314] sm:$0xf]
  %v243 = vld [vmem:[%s1 + $0x318] sm:$0xf]
  %v244 = vld [vmem:[%s1 + $0x31c] sm:$0xf]
  %v245 = vld [vmem:[%s2] sm:$0x1]
  %v247 = vperm.slane %v245, 0
  %v277 = vunpack.c.l.b16 %v17
  %v278 = vunpack.c.h.b16 %v17
  %v279 = vunpack.c.l.b16 %v18
  %v280 = vunpack.c.h.b16 %v18
  %v281 = vunpack.c.l.b16 %v19
  %v282 = vunpack.c.h.b16 %v19
  %v283 = vunpack.c.l.b16 %v20
  %v284 = vunpack.c.h.b16 %v20
  %v285 = vunpack.c.l.b16 %v21
  %v286 = vunpack.c.h.b16 %v21
  %v287 = vunpack.c.l.b16 %v22
  %v288 = vunpack.c.h.b16 %v22
  %v289 = vunpack.c.l.b16 %v23
  %v290 = vunpack.c.l.b16 %v24
  %v291 = vunpack.c.h.b16 %v24
  %v292 = vunpack.c.l.b16 %v25
  %v293 = vunpack.c.h.b16 %v25
  %v294 = vunpack.c.l.b16 %v26
  %v295 = vunpack.c.h.b16 %v26
  %v296 = vunpack.c.l.b16 %v27
  %v297 = vunpack.c.h.b16 %v27
  %v298 = vunpack.c.l.b16 %v28
  %v299 = vunpack.c.h.b16 %v28
  %v300 = vunpack.c.l.b16 %v29
  %v301 = vunpack.c.h.b16 %v29
  %v302 = vunpack.c.l.b16 %v30
  %v303 = vunpack.c.l.b16 %v31
  %v304 = vunpack.c.h.b16 %v31
  %v305 = vunpack.c.l.b16 %v32
  %v306 = vunpack.c.h.b16 %v32
  %v307 = vunpack.c.l.b16 %v33
  %v308 = vunpack.c.h.b16 %v33
  %v309 = vunpack.c.l.b16 %v34
  %v310 = vunpack.c.h.b16 %v34
  %v311 = vunpack.c.l.b16 %v35
  %v312 = vunpack.c.h.b16 %v35
  %v313 = vunpack.c.l.b16 %v36
  %v314 = vunpack.c.h.b16 %v36
  %v315 = vunpack.c.l.b16 %v37
  %v316 = vunpack.c.l.b16 %v38
  %v317 = vunpack.c.h.b16 %v38
  %v318 = vunpack.c.l.b16 %v39
  %v319 = vunpack.c.h.b16 %v39
  %v320 = vunpack.c.l.b16 %v40
  %v321 = vunpack.c.h.b16 %v40
  %v322 = vunpack.c.l.b16 %v41
  %v323 = vunpack.c.h.b16 %v41
  %v324 = vunpack.c.l.b16 %v42
  %v325 = vunpack.c.h.b16 %v42
  %v326 = vunpack.c.l.b16 %v43
  %v327 = vunpack.c.h.b16 %v43
  %v328 = vunpack.c.l.b16 %v44
  %v329 = vpack.c.b16 %v290, %v277
  %v330 = vpack.c.b16 %v291, %v278
  %v331 = vpack.c.b16 %v292, %v279
  %v332 = vpack.c.b16 %v293, %v280
  %v333 = vpack.c.b16 %v294, %v281
  %v334 = vpack.c.b16 %v295, %v282
  %v335 = vpack.c.b16 %v296, %v283
  %v336 = vpack.c.b16 %v297, %v284
  %v337 = vpack.c.b16 %v298, %v285
  %v338 = vpack.c.b16 %v299, %v286
  %v339 = vpack.c.b16 %v300, %v287
  %v340 = vpack.c.b16 %v301, %v288
  %v341 = vpack.c.b16 %v302, %v289
  %v342 = vpack.c.b16 %v316, %v303
  %v343 = vpack.c.b16 %v317, %v304
  %v344 = vpack.c.b16 %v318, %v305
  %v345 = vpack.c.b16 %v319, %v306
  %v346 = vpack.c.b16 %v320, %v307
  %v347 = vpack.c.b16 %v321, %v308
  %v348 = vpack.c.b16 %v322, %v309
  %v349 = vpack.c.b16 %v323, %v310
  %v350 = vpack.c.b16 %v324, %v311
  %v351 = vpack.c.b16 %v325, %v312
  %v352 = vpack.c.b16 %v326, %v313
  %v353 = vpack.c.b16 %v327, %v314
  %v354 = vpack.c.b16 %v328, %v315
  %v579 = vunpack.c.l.b16 %v45
  %v580 = vunpack.c.l.b16 %v46
  %v581 = vunpack.c.l.b16 %v47
  %v582 = vunpack.c.l.b16 %v48
  %v583 = vunpack.c.l.b16 %v49
  %v584 = vunpack.c.l.b16 %v50
  %v585 = vunpack.c.l.b16 %v51
  %v586 = vunpack.c.l.b16 %v52
  %v587 = vunpack.c.l.b16 %v53
  %v588 = vunpack.c.l.b16 %v54
  %v589 = vunpack.c.l.b16 %v55
  %v590 = vunpack.c.l.b16 %v56
  %v591 = vunpack.c.l.b16 %v57
  %v592 = vunpack.c.l.b16 %v58
  %v593 = vunpack.c.l.b16 %v59
  %v594 = vunpack.c.l.b16 %v60
  %v595 = vunpack.c.l.b16 %v61
  %v596 = vunpack.c.l.b16 %v62
  %v597 = vunpack.c.l.b16 %v63
  %v598 = vunpack.c.l.b16 %v64
  %v599 = vunpack.c.l.b16 %v65
  %v600 = vunpack.c.l.b16 %v66
  %v601 = vunpack.c.l.b16 %v67
  %v602 = vunpack.c.l.b16 %v68
  %v603 = vunpack.c.l.b16 %v69
  %v604 = vunpack.c.l.b16 %v70
  %v605 = vunpack.c.l.b16 %v71
  %v606 = vunpack.c.l.b16 %v72
  %v607 = vunpack.c.l.b16 %v73
  %v608 = vunpack.c.l.b16 %v74
  %v609 = vunpack.c.l.b16 %v75
  %v610 = vunpack.c.l.b16 %v76
  %v611 = vunpack.c.l.b16 %v77
  %v612 = vunpack.c.l.b16 %v78
  %v613 = vunpack.c.l.b16 %v79
  %v614 = vunpack.c.l.b16 %v80
  %v615 = vunpack.c.l.b16 %v81
  %v616 = vunpack.c.l.b16 %v82
  %v617 = vunpack.c.l.b16 %v83
  %v618 = vunpack.c.l.b16 %v84
  %v619 = vunpack.c.l.b16 %v85
  %v620 = vunpack.c.l.b16 %v86
  %v621 = vunpack.c.l.b16 %v87
  %v622 = vunpack.c.l.b16 %v88
  %v623 = vunpack.c.l.b16 %v89
  %v624 = vunpack.c.l.b16 %v90
  %v625 = vunpack.c.l.b16 %v91
  %v626 = vunpack.c.l.b16 %v92
  %v627 = vunpack.c.l.b16 %v93
  %v628 = vunpack.c.l.b16 %v94
  %v629 = vunpack.c.l.b16 %v95
  %v630 = vunpack.c.l.b16 %v96
  %v631 = vunpack.c.l.b16 %v97
  %v632 = vunpack.c.l.b16 %v98
  %v633 = vunpack.c.l.b16 %v99
  %v634 = vunpack.c.l.b16 %v100
  %v635 = vunpack.c.l.b16 %v101
  %v636 = vunpack.c.l.b16 %v102
  %v637 = vunpack.c.l.b16 %v103
  %v638 = vunpack.c.l.b16 %v104
  %v639 = vunpack.c.l.b16 %v105
  %v640 = vunpack.c.l.b16 %v106
  %v641 = vunpack.c.l.b16 %v107
  %v642 = vunpack.c.l.b16 %v108
  %v643 = vunpack.c.l.b16 %v109
  %v644 = vunpack.c.l.b16 %v110
  %v645 = vunpack.c.l.b16 %v111
  %v646 = vunpack.c.l.b16 %v112
  %v647 = vunpack.c.l.b16 %v113
  %v648 = vunpack.c.l.b16 %v114
  %v649 = vunpack.c.l.b16 %v115
  %v650 = vunpack.c.l.b16 %v116
  %v651 = vunpack.c.l.b16 %v117
  %v652 = vunpack.c.l.b16 %v118
  %v653 = vunpack.c.l.b16 %v119
  %v654 = vunpack.c.l.b16 %v120
  %v655 = vunpack.c.l.b16 %v121
  %v656 = vunpack.c.l.b16 %v122
  %v657 = vunpack.c.l.b16 %v123
  %v658 = vunpack.c.l.b16 %v124
  %v659 = vunpack.c.l.b16 %v125
  %v660 = vunpack.c.l.b16 %v126
  %v661 = vunpack.c.l.b16 %v127
  %v662 = vunpack.c.l.b16 %v128
  %v663 = vunpack.c.l.b16 %v129
  %v664 = vunpack.c.l.b16 %v130
  %v665 = vunpack.c.l.b16 %v131
  %v666 = vunpack.c.l.b16 %v132
  %v667 = vunpack.c.l.b16 %v133
  %v668 = vunpack.c.l.b16 %v134
  %v669 = vunpack.c.l.b16 %v135
  %v670 = vunpack.c.l.b16 %v136
  %v671 = vunpack.c.l.b16 %v137
  %v672 = vunpack.c.l.b16 %v138
  %v673 = vunpack.c.l.b16 %v139
  %v674 = vunpack.c.l.b16 %v140
  %v675 = vunpack.c.l.b16 %v141
  %v676 = vunpack.c.l.b16 %v142
  %v677 = vunpack.c.l.b16 %v143
  %v678 = vunpack.c.l.b16 %v144
  %v679 = vunpack.c.l.b16 %v145
  %v680 = vunpack.c.l.b16 %v146
  %v681 = vunpack.c.l.b16 %v147
  %v682 = vunpack.c.l.b16 %v148
  %v683 = vunpack.c.l.b16 %v149
  %v684 = vunpack.c.l.b16 %v150
  %v685 = vunpack.c.l.b16 %v151
  %v686 = vunpack.c.l.b16 %v152
  %v687 = vunpack.c.l.b16 %v153
  %v688 = vunpack.c.l.b16 %v154
  %v689 = vunpack.c.l.b16 %v155
  %v690 = vunpack.c.l.b16 %v156
  %v691 = vunpack.c.l.b16 %v157
  %v692 = vunpack.c.l.b16 %v158
  %v693 = vunpack.c.l.b16 %v159
  %v694 = vunpack.c.l.b16 %v160
  %v695 = vunpack.c.l.b16 %v161
  %v696 = vunpack.c.l.b16 %v162
  %v697 = vunpack.c.l.b16 %v163
  %v698 = vunpack.c.l.b16 %v164
  %v699 = vunpack.c.l.b16 %v165
  %v700 = vunpack.c.l.b16 %v166
  %v701 = vunpack.c.l.b16 %v167
  %v702 = vunpack.c.l.b16 %v168
  %v703 = vunpack.c.l.b16 %v169
  %v704 = vunpack.c.l.b16 %v170
  %v705 = vunpack.c.l.b16 %v171
  %v706 = vunpack.c.l.b16 %v172
  %v707 = vunpack.c.l.b16 %v173
  %v708 = vunpack.c.l.b16 %v174
  %v709 = vunpack.c.l.b16 %v175
  %v710 = vunpack.c.l.b16 %v176
  %v711 = vunpack.c.l.b16 %v177
  %v712 = vunpack.c.l.b16 %v178
  %v713 = vunpack.c.l.b16 %v179
  %v714 = vunpack.c.l.b16 %v180
  %v715 = vunpack.c.l.b16 %v181
  %v716 = vunpack.c.l.b16 %v182
  %v717 = vunpack.c.l.b16 %v183
  %v718 = vunpack.c.l.b16 %v184
  %v719 = vunpack.c.l.b16 %v185
  %v720 = vunpack.c.l.b16 %v186
  %v721 = vunpack.c.l.b16 %v187
  %v722 = vunpack.c.l.b16 %v188
  %v723 = vunpack.c.l.b16 %v189
  %v724 = vunpack.c.l.b16 %v190
  %v725 = vunpack.c.l.b16 %v191
  %v726 = vunpack.c.l.b16 %v192
  %v727 = vunpack.c.l.b16 %v193
  %v728 = vunpack.c.l.b16 %v194
  %v729 = vunpack.c.l.b16 %v195
  %v730 = vunpack.c.l.b16 %v196
  %v731 = vunpack.c.l.b16 %v197
  %v732 = vunpack.c.l.b16 %v198
  %v733 = vunpack.c.l.b16 %v199
  %v734 = vunpack.c.l.b16 %v200
  %v735 = vunpack.c.l.b16 %v201
  %v736 = vunpack.c.l.b16 %v202
  %v737 = vunpack.c.l.b16 %v203
  %v738 = vunpack.c.l.b16 %v204
  %v739 = vunpack.c.l.b16 %v205
  %v740 = vunpack.c.l.b16 %v206
  %v741 = vunpack.c.l.b16 %v207
  %v742 = vunpack.c.l.b16 %v208
  %v743 = vunpack.c.l.b16 %v209
  %v744 = vunpack.c.l.b16 %v210
  %v745 = vunpack.c.l.b16 %v211
  %v746 = vunpack.c.l.b16 %v212
  %v747 = vunpack.c.l.b16 %v213
  %v748 = vunpack.c.l.b16 %v214
  %v749 = vunpack.c.l.b16 %v215
  %v750 = vunpack.c.l.b16 %v216
  %v751 = vunpack.c.l.b16 %v217
  %v752 = vunpack.c.l.b16 %v218
  %v753 = vunpack.c.l.b16 %v219
  %v754 = vunpack.c.l.b16 %v220
  %v755 = vunpack.c.l.b16 %v221
  %v756 = vunpack.c.l.b16 %v222
  %v757 = vunpack.c.l.b16 %v223
  %v758 = vunpack.c.l.b16 %v224
  %v759 = vunpack.c.l.b16 %v225
  %v760 = vunpack.c.l.b16 %v226
  %v761 = vunpack.c.l.b16 %v227
  %v762 = vunpack.c.l.b16 %v228
  %v763 = vunpack.c.l.b16 %v229
  %v764 = vunpack.c.l.b16 %v230
  %v765 = vunpack.c.l.b16 %v231
  %v766 = vunpack.c.l.b16 %v232
  %v767 = vunpack.c.l.b16 %v233
  %v768 = vunpack.c.l.b16 %v234
  %v769 = vunpack.c.l.b16 %v235
  %v770 = vunpack.c.l.b16 %v236
  %v771 = vunpack.c.l.b16 %v237
  %v772 = vunpack.c.l.b16 %v238
  %v773 = vunpack.c.l.b16 %v239
  %v774 = vunpack.c.l.b16 %v240
  %v775 = vunpack.c.l.b16 %v241
  %v776 = vunpack.c.l.b16 %v242
  %v777 = vunpack.c.l.b16 %v243
  %v778 = vunpack.c.l.b16 %v244
  %v779 = vpack.c.b16 %v580, %v579
  %v780 = vpack.c.b16 %v582, %v581
  %v781 = vpack.c.b16 %v584, %v583
  %v782 = vpack.c.b16 %v586, %v585
  %v783 = vpack.c.b16 %v588, %v587
  %v784 = vpack.c.b16 %v590, %v589
  %v785 = vpack.c.b16 %v592, %v591
  %v786 = vpack.c.b16 %v594, %v593
  %v787 = vpack.c.b16 %v596, %v595
  %v788 = vpack.c.b16 %v598, %v597
  %v789 = vpack.c.b16 %v600, %v599
  %v790 = vpack.c.b16 %v602, %v601
  %v791 = vpack.c.b16 %v604, %v603
  %v792 = vpack.c.b16 %v606, %v605
  %v793 = vpack.c.b16 %v608, %v607
  %v794 = vpack.c.b16 %v610, %v609
  %v795 = vpack.c.b16 %v612, %v611
  %v796 = vpack.c.b16 %v614, %v613
  %v797 = vpack.c.b16 %v616, %v615
  %v798 = vpack.c.b16 %v618, %v617
  %v799 = vpack.c.b16 %v620, %v619
  %v800 = vpack.c.b16 %v622, %v621
  %v801 = vpack.c.b16 %v624, %v623
  %v802 = vpack.c.b16 %v626, %v625
  %v803 = vpack.c.b16 %v628, %v627
  %v804 = vpack.c.b16 %v630, %v629
  %v805 = vpack.c.b16 %v632, %v631
  %v806 = vpack.c.b16 %v634, %v633
  %v807 = vpack.c.b16 %v636, %v635
  %v808 = vpack.c.b16 %v638, %v637
  %v809 = vpack.c.b16 %v640, %v639
  %v810 = vpack.c.b16 %v642, %v641
  %v811 = vpack.c.b16 %v644, %v643
  %v812 = vpack.c.b16 %v646, %v645
  %v813 = vpack.c.b16 %v648, %v647
  %v814 = vpack.c.b16 %v650, %v649
  %v815 = vpack.c.b16 %v652, %v651
  %v816 = vpack.c.b16 %v654, %v653
  %v817 = vpack.c.b16 %v656, %v655
  %v818 = vpack.c.b16 %v658, %v657
  %v819 = vpack.c.b16 %v660, %v659
  %v820 = vpack.c.b16 %v662, %v661
  %v821 = vpack.c.b16 %v664, %v663
  %v822 = vpack.c.b16 %v666, %v665
  %v823 = vpack.c.b16 %v668, %v667
  %v824 = vpack.c.b16 %v670, %v669
  %v825 = vpack.c.b16 %v672, %v671
  %v826 = vpack.c.b16 %v674, %v673
  %v827 = vpack.c.b16 %v676, %v675
  %v828 = vpack.c.b16 %v678, %v677
  %v829 = vpack.c.b16 %v680, %v679
  %v830 = vpack.c.b16 %v682, %v681
  %v831 = vpack.c.b16 %v684, %v683
  %v832 = vpack.c.b16 %v686, %v685
  %v833 = vpack.c.b16 %v688, %v687
  %v834 = vpack.c.b16 %v690, %v689
  %v835 = vpack.c.b16 %v692, %v691
  %v836 = vpack.c.b16 %v694, %v693
  %v837 = vpack.c.b16 %v696, %v695
  %v838 = vpack.c.b16 %v698, %v697
  %v839 = vpack.c.b16 %v700, %v699
  %v840 = vpack.c.b16 %v702, %v701
  %v841 = vpack.c.b16 %v704, %v703
  %v842 = vpack.c.b16 %v706, %v705
  %v843 = vpack.c.b16 %v708, %v707
  %v844 = vpack.c.b16 %v710, %v709
  %v845 = vpack.c.b16 %v712, %v711
  %v846 = vpack.c.b16 %v714, %v713
  %v847 = vpack.c.b16 %v716, %v715
  %v848 = vpack.c.b16 %v718, %v717
  %v849 = vpack.c.b16 %v720, %v719
  %v850 = vpack.c.b16 %v722, %v721
  %v851 = vpack.c.b16 %v724, %v723
  %v852 = vpack.c.b16 %v726, %v725
  %v853 = vpack.c.b16 %v728, %v727
  %v854 = vpack.c.b16 %v730, %v729
  %v855 = vpack.c.b16 %v732, %v731
  %v856 = vpack.c.b16 %v734, %v733
  %v857 = vpack.c.b16 %v736, %v735
  %v858 = vpack.c.b16 %v738, %v737
  %v859 = vpack.c.b16 %v740, %v739
  %v860 = vpack.c.b16 %v742, %v741
  %v861 = vpack.c.b16 %v744, %v743
  %v862 = vpack.c.b16 %v746, %v745
  %v863 = vpack.c.b16 %v748, %v747
  %v864 = vpack.c.b16 %v750, %v749
  %v865 = vpack.c.b16 %v752, %v751
  %v866 = vpack.c.b16 %v754, %v753
  %v867 = vpack.c.b16 %v756, %v755
  %v868 = vpack.c.b16 %v758, %v757
  %v869 = vpack.c.b16 %v760, %v759
  %v870 = vpack.c.b16 %v762, %v761
  %v871 = vpack.c.b16 %v764, %v763
  %v872 = vpack.c.b16 %v766, %v765
  %v873 = vpack.c.b16 %v768, %v767
  %v874 = vpack.c.b16 %v770, %v769
  %v875 = vpack.c.b16 %v772, %v771
  %v876 = vpack.c.b16 %v774, %v773
  %v877 = vpack.c.b16 %v776, %v775
  %v878 = vpack.c.b16 %v778, %v777
  %vm979 = vcmask 523264
  %v981 = vsel %vm979, %v341, 0
  %v984 = vsel %vm979, %v354, 0
  %986 = vmatpush.bf16.msra.mxu0 %v786
  %987 = vmatpush.bf16.msra.mxu0 %v785
  %988 = vmatpush.bf16.msra.mxu0 %v784
  %989 = vmatpush.bf16.msra.mxu0 %v783
  %990 = vmatpush.bf16.msra.mxu0 %v782
  %991 = vmatpush.bf16.msra.mxu0 %v781
  %992 = vmatpush.bf16.msra.mxu0 %v780
  %993 = vmatpush.bf16.msra.mxu0 %v779
  %994 = vmatmul.bf16.gmra.mxu0 %v329
  %v995 = vpop.f32.mrf.mxu0
  %v996 = vadd.f32 %v247, %v995
  %v997 = vpop.f32.mrf.mxu0
  %v998 = vadd.f32 %v247, %v997
  %999 = vmatmul.bf16.gmra.mxu0 %v342
  %v1000 = vpop.f32.mrf.mxu0
  %v1001 = vadd.f32 %v247, %v1000
  %v1002 = vpop.f32.mrf.mxu0
  %v1003 = vadd.f32 %v247, %v1002
  %1004 = vdwg.mxu0
  %1005 = vmatpush.bf16.msra.mxu0 %v794
  %1006 = vmatpush.bf16.msra.mxu0 %v793
  %1007 = vmatpush.bf16.msra.mxu0 %v792
  %1008 = vmatpush.bf16.msra.mxu0 %v791
  %1009 = vmatpush.bf16.msra.mxu0 %v790
  %1010 = vmatpush.bf16.msra.mxu0 %v789
  %1011 = vmatpush.bf16.msra.mxu0 %v788
  %1012 = vmatpush.bf16.msra.mxu0 %v787
  %1013 = vmatmul.bf16.gmra.mxu0 %v330
  %v1014 = vpop.f32.mrf.mxu0
  %v1015 = vadd.f32 %v996, %v1014
  %v1016 = vpop.f32.mrf.mxu0
  %v1017 = vadd.f32 %v998, %v1016
  %1018 = vmatmul.bf16.gmra.mxu0 %v343
  %v1019 = vpop.f32.mrf.mxu0
  %v1020 = vadd.f32 %v1001, %v1019
  %v1021 = vpop.f32.mrf.mxu0
  %v1022 = vadd.f32 %v1003, %v1021
  %1023 = vdwg.mxu0
  %1024 = vmatpush.bf16.msra.mxu0 %v802
  %1025 = vmatpush.bf16.msra.mxu0 %v801
  %1026 = vmatpush.bf16.msra.mxu0 %v800
  %1027 = vmatpush.bf16.msra.mxu0 %v799
  %1028 = vmatpush.bf16.msra.mxu0 %v798
  %1029 = vmatpush.bf16.msra.mxu0 %v797
  %1030 = vmatpush.bf16.msra.mxu0 %v796
  %1031 = vmatpush.bf16.msra.mxu0 %v795
  %1032 = vmatmul.bf16.gmra.mxu0 %v331
  %v1033 = vpop.f32.mrf.mxu0
  %v1034 = vadd.f32 %v1015, %v1033
  %v1035 = vpop.f32.mrf.mxu0
  %v1036 = vadd.f32 %v1017, %v1035
  %1037 = vmatmul.bf16.gmra.mxu0 %v344
  %v1038 = vpop.f32.mrf.mxu0
  %v1039 = vadd.f32 %v1020, %v1038
  %v1040 = vpop.f32.mrf.mxu0
  %v1041 = vadd.f32 %v1022, %v1040
  %1042 = vdwg.mxu0
  %1043 = vmatpush.bf16.msra.mxu0 %v810
  %1044 = vmatpush.bf16.msra.mxu0 %v809
  %1045 = vmatpush.bf16.msra.mxu0 %v808
  %1046 = vmatpush.bf16.msra.mxu0 %v807
  %1047 = vmatpush.bf16.msra.mxu0 %v806
  %1048 = vmatpush.bf16.msra.mxu0 %v805
  %1049 = vmatpush.bf16.msra.mxu0 %v804
  %1050 = vmatpush.bf16.msra.mxu0 %v803
  %1051 = vmatmul.bf16.gmra.mxu0 %v332
  %v1052 = vpop.f32.mrf.mxu0
  %v1053 = vadd.f32 %v1034, %v1052
  %v1054 = vpop.f32.mrf.mxu0
  %v1055 = vadd.f32 %v1036, %v1054
  %1056 = vmatmul.bf16.gmra.mxu0 %v345
  %v1057 = vpop.f32.mrf.mxu0
  %v1058 = vadd.f32 %v1039, %v1057
  %v1059 = vpop.f32.mrf.mxu0
  %v1060 = vadd.f32 %v1041, %v1059
  %1061 = vdwg.mxu0
  %1062 = vmatpush.bf16.msra.mxu0 %v818
  %1063 = vmatpush.bf16.msra.mxu0 %v817
  %1064 = vmatpush.bf16.msra.mxu0 %v816
  %1065 = vmatpush.bf16.msra.mxu0 %v815
  %1066 = vmatpush.bf16.msra.mxu0 %v814
  %1067 = vmatpush.bf16.msra.mxu0 %v813
  %1068 = vmatpush.bf16.msra.mxu0 %v812
  %1069 = vmatpush.bf16.msra.mxu0 %v811
  %1070 = vmatmul.bf16.gmra.mxu0 %v333
  %v1071 = vpop.f32.mrf.mxu0
  %v1072 = vadd.f32 %v1053, %v1071
  %v1073 = vpop.f32.mrf.mxu0
  %v1074 = vadd.f32 %v1055, %v1073
  %1075 = vmatmul.bf16.gmra.mxu0 %v346
  %v1076 = vpop.f32.mrf.mxu0
  %v1077 = vadd.f32 %v1058, %v1076
  %v1078 = vpop.f32.mrf.mxu0
  %v1079 = vadd.f32 %v1060, %v1078
  %1080 = vdwg.mxu0
  %1081 = vmatpush.bf16.msra.mxu0 %v826
  %1082 = vmatpush.bf16.msra.mxu0 %v825
  %1083 = vmatpush.bf16.msra.mxu0 %v824
  %1084 = vmatpush.bf16.msra.mxu0 %v823
  %1085 = vmatpush.bf16.msra.mxu0 %v822
  %1086 = vmatpush.bf16.msra.mxu0 %v821
  %1087 = vmatpush.bf16.msra.mxu0 %v820
  %1088 = vmatpush.bf16.msra.mxu0 %v819
  %1089 = vmatmul.bf16.gmra.mxu0 %v334
  %v1090 = vpop.f32.mrf.mxu0
  %v1091 = vadd.f32 %v1072, %v1090
  %v1092 = vpop.f32.mrf.mxu0
  %v1093 = vadd.f32 %v1074, %v1092
  %1094 = vmatmul.bf16.gmra.mxu0 %v347
  %v1095 = vpop.f32.mrf.mxu0
  %v1096 = vadd.f32 %v1077, %v1095
  %v1097 = vpop.f32.mrf.mxu0
  %v1098 = vadd.f32 %v1079, %v1097
  %1099 = vdwg.mxu0
  %1100 = vmatpush.bf16.msra.mxu0 %v834
  %1101 = vmatpush.bf16.msra.mxu0 %v833
  %1102 = vmatpush.bf16.msra.mxu0 %v832
  %1103 = vmatpush.bf16.msra.mxu0 %v831
  %1104 = vmatpush.bf16.msra.mxu0 %v830
  %1105 = vmatpush.bf16.msra.mxu0 %v829
  %1106 = vmatpush.bf16.msra.mxu0 %v828
  %1107 = vmatpush.bf16.msra.mxu0 %v827
  %1108 = vmatmul.bf16.gmra.mxu0 %v335
  %v1109 = vpop.f32.mrf.mxu0
  %v1110 = vadd.f32 %v1091, %v1109
  %v1111 = vpop.f32.mrf.mxu0
  %v1112 = vadd.f32 %v1093, %v1111
  %1113 = vmatmul.bf16.gmra.mxu0 %v348
  %v1114 = vpop.f32.mrf.mxu0
  %v1115 = vadd.f32 %v1096, %v1114
  %v1116 = vpop.f32.mrf.mxu0
  %v1117 = vadd.f32 %v1098, %v1116
  %1118 = vdwg.mxu0
  %1119 = vmatpush.bf16.msra.mxu0 %v842
  %1120 = vmatpush.bf16.msra.mxu0 %v841
  %1121 = vmatpush.bf16.msra.mxu0 %v840
  %1122 = vmatpush.bf16.msra.mxu0 %v839
  %1123 = vmatpush.bf16.msra.mxu0 %v838
  %1124 = vmatpush.bf16.msra.mxu0 %v837
  %1125 = vmatpush.bf16.msra.mxu0 %v836
  %1126 = vmatpush.bf16.msra.mxu0 %v835
  %1127 = vmatmul.bf16.gmra.mxu0 %v336
  %v1128 = vpop.f32.mrf.mxu0
  %v1129 = vadd.f32 %v1110, %v1128
  %v1130 = vpop.f32.mrf.mxu0
  %v1131 = vadd.f32 %v1112, %v1130
  %1132 = vmatmul.bf16.gmra.mxu0 %v349
  %v1133 = vpop.f32.mrf.mxu0
  %v1134 = vadd.f32 %v1115, %v1133
  %v1135 = vpop.f32.mrf.mxu0
  %v1136 = vadd.f32 %v1117, %v1135
  %1137 = vdwg.mxu0
  %1138 = vmatpush.bf16.msra.mxu0 %v850
  %1139 = vmatpush.bf16.msra.mxu0 %v849
  %1140 = vmatpush.bf16.msra.mxu0 %v848
  %1141 = vmatpush.bf16.msra.mxu0 %v847
  %1142 = vmatpush.bf16.msra.mxu0 %v846
  %1143 = vmatpush.bf16.msra.mxu0 %v845
  %1144 = vmatpush.bf16.msra.mxu0 %v844
  %1145 = vmatpush.bf16.msra.mxu0 %v843
  %1146 = vmatmul.bf16.gmra.mxu0 %v337
  %v1147 = vpop.f32.mrf.mxu0
  %v1148 = vadd.f32 %v1129, %v1147
  %v1149 = vpop.f32.mrf.mxu0
  %v1150 = vadd.f32 %v1131, %v1149
  %1151 = vmatmul.bf16.gmra.mxu0 %v350
  %v1152 = vpop.f32.mrf.mxu0
  %v1153 = vadd.f32 %v1134, %v1152
  %v1154 = vpop.f32.mrf.mxu0
  %v1155 = vadd.f32 %v1136, %v1154
  %1156 = vdwg.mxu0
  %1157 = vmatpush.bf16.msra.mxu0 %v858
  %1158 = vmatpush.bf16.msra.mxu0 %v857
  %1159 = vmatpush.bf16.msra.mxu0 %v856
  %1160 = vmatpush.bf16.msra.mxu0 %v855
  %1161 = vmatpush.bf16.msra.mxu0 %v854
  %1162 = vmatpush.bf16.msra.mxu0 %v853
  %1163 = vmatpush.bf16.msra.mxu0 %v852
  %1164 = vmatpush.bf16.msra.mxu0 %v851
  %1165 = vmatmul.bf16.gmra.mxu0 %v338
  %v1166 = vpop.f32.mrf.mxu0
  %v1167 = vadd.f32 %v1148, %v1166
  %v1168 = vpop.f32.mrf.mxu0
  %v1169 = vadd.f32 %v1150, %v1168
  %1170 = vmatmul.bf16.gmra.mxu0 %v351
  %v1171 = vpop.f32.mrf.mxu0
  %v1172 = vadd.f32 %v1153, %v1171
  %v1173 = vpop.f32.mrf.mxu0
  %v1174 = vadd.f32 %v1155, %v1173
  %1175 = vdwg.mxu0
  %1176 = vmatpush.bf16.msra.mxu0 %v866
  %1177 = vmatpush.bf16.msra.mxu0 %v865
  %1178 = vmatpush.bf16.msra.mxu0 %v864
  %1179 = vmatpush.bf16.msra.mxu0 %v863
  %1180 = vmatpush.bf16.msra.mxu0 %v862
  %1181 = vmatpush.bf16.msra.mxu0 %v861
  %1182 = vmatpush.bf16.msra.mxu0 %v860
  %1183 = vmatpush.bf16.msra.mxu0 %v859
  %1184 = vmatmul.bf16.gmra.mxu0 %v339
  %v1185 = vpop.f32.mrf.mxu0
  %v1186 = vadd.f32 %v1167, %v1185
  %v1187 = vpop.f32.mrf.mxu0
  %v1188 = vadd.f32 %v1169, %v1187
  %1189 = vmatmul.bf16.gmra.mxu0 %v352
  %v1190 = vpop.f32.mrf.mxu0
  %v1191 = vadd.f32 %v1172, %v1190
  %v1192 = vpop.f32.mrf.mxu0
  %v1193 = vadd.f32 %v1174, %v1192
  %1194 = vdwg.mxu0
  %1195 = vmatpush.bf16.msra.mxu0 %v874
  %1196 = vmatpush.bf16.msra.mxu0 %v873
  %1197 = vmatpush.bf16.msra.mxu0 %v872
  %1198 = vmatpush.bf16.msra.mxu0 %v871
  %1199 = vmatpush.bf16.msra.mxu0 %v870
  %1200 = vmatpush.bf16.msra.mxu0 %v869
  %1201 = vmatpush.bf16.msra.mxu0 %v868
  %1202 = vmatpush.bf16.msra.mxu0 %v867
  %1203 = vmatmul.bf16.gmra.mxu0 %v340
  %v1204 = vpop.f32.mrf.mxu0
  %v1205 = vadd.f32 %v1186, %v1204
  %v1206 = vpop.f32.mrf.mxu0
  %v1207 = vadd.f32 %v1188, %v1206
  %1208 = vmatmul.bf16.gmra.mxu0 %v353
  %v1209 = vpop.f32.mrf.mxu0
  %v1210 = vadd.f32 %v1191, %v1209
  %v1211 = vpop.f32.mrf.mxu0
  %v1212 = vadd.f32 %v1193, %v1211
  %1213 = vdwg.mxu0
  %1214 = vmatpush.bf16.msra.mxu0 0
  %1215 = vmatpush.bf16.msra.mxu0 0
  %1216 = vmatpush.bf16.msra.mxu0 0
  %1217 = vmatpush.bf16.msra.mxu0 0
  %1218 = vmatpush.bf16.msra.mxu0 %v878
  %1219 = vmatpush.bf16.msra.mxu0 %v877
  %1220 = vmatpush.bf16.msra.mxu0 %v876
  %1221 = vmatpush.bf16.msra.mxu0 %v875
  %1222 = vmatmul.bf16.gmra.mxu0 %v981
  %v1223 = vpop.f32.mrf.mxu0
  %v1224 = vadd.f32 %v1205, %v1223
  %v1225 = vpop.f32.mrf.mxu0
  %v1226 = vadd.f32 %v1207, %v1225
  %1227 = vmatmul.bf16.gmra.mxu0 %v984
  %v1228 = vpop.f32.mrf.mxu0
  %v1229 = vadd.f32 %v1210, %v1228
  %v1230 = vpop.f32.mrf.mxu0
  %v1231 = vadd.f32 %v1212, %v1230
  %1232 = vdwg.mxu0
  %1233 = vst [vmem:[%s3] sm:$0xff] %v1224
  %1234 = vst [vmem:[%s3 + $0x8] sm:$0xff] %v1226
  %1235 = vst [vmem:[%s3 + $0x10] sm:$0xff] %v1229
  %1236 = vst [vmem:[%s3 + $0x18] sm:$0xff] %v1231
  %v1237 = vadd.f32 %v1224, %v1226
  %v1238 = vadd.f32 %v1237, %v1229
  %v1239 = vadd.f32 %v1238, %v1231
  %v1240 = vrot.slane %v1239, 4
  %v1241 = vadd.f32 %v1239, %v1240
  %v1242 = vrot.slane %v1241, 2
  %v1243 = vadd.f32 %v1241, %v1242
  %v1244 = vrot.slane %v1243, 1
  %v1245 = vadd.f32 %v1243, %v1244
  %v1246 = vmul.f32 %v1224, %v1224
  %v1247 = vmul.f32 %v1226, %v1226
  %v1248 = vmul.f32 %v1229, %v1229
  %v1249 = vmul.f32 %v1231, %v1231
  %v1250 = vadd.f32 %v1246, %v1247
  %v1251 = vadd.f32 %v1250, %v1248
  %v1252 = vadd.f32 %v1251, %v1249
  %v1253 = vrot.slane %v1252, 4
  %v1254 = vadd.f32 %v1252, %v1253
  %v1255 = vrot.slane %v1254, 2
  %v1256 = vadd.f32 %v1254, %v1255
  %v1257 = vrot.slane %v1256, 1
  %v1258 = vadd.f32 %v1256, %v1257
  %vm1259 = vcmask 1040384
  %v1260 = vsel %vm1259, %v1245, %v1258
  %1261 = vst [vmem:[%s4] sm:$0x3] %v1260
  // Predicated region
  $region14: #{model_d_forward.4} parent=0 // pred_check
    _
  $region15: #{model_d_forward.4} parent=0 // pred_check_branch
    %1263 = sbr.rel (0) target = $region17
  $region16: #{model_d_forward.4} parent=0 // pred_region
    _
  $region17: #{model_d_forward.4} parent=0 // pred_fallthru
    _
  // Predicated region
  $region18: #{model_d_forward.4} parent=0 // pred_check
    _
  $region19: #{model_d_forward.4} parent=0 // pred_check_branch
    %1265 = sbr.rel (0) target = $region21
  $region20: #{model_d_forward.4} parent=0 // pred_region
    _
  $region21: #{model_d_forward.4} parent=0 // pred_fallthru
    _
  // Predicated region
  $region22: #{model_d_forward.4} parent=0 // pred_check
    _
  $region23: #{model_d_forward.4} parent=0 // pred_check_branch
    %1267 = sbr.rel (0) target = $region25
  $region24: #{model_d_forward.4} parent=0 // pred_region
    _
  $region25: #{model_d_forward.4} parent=0 // pred_fallthru
    _
  // Predicated region
  $region26: #{model_d_forward.4} parent=0 // pred_check
    _
  $region27: #{model_d_forward.4} parent=0 // pred_check_branch
    %1269 = sbr.rel (0) target = $region29
  $region28: #{model_d_forward.4} parent=0 // pred_region
    _
  $region29: #{model_d_forward.4} parent=0 // pred_fallthru
    _

// kernel: model_d_forward.5
$region0: #{model_d_forward.5}
  #allocation0 [shape = 'u32[]', space=smem, size = 0x4, offset = 0x4, fixed_abs, tag = 'smem constant byte address 0x4 - core index']
  #allocation1 [shape = 'u32[72,128]{1,0:T(1,128)}', space=vmem, size = 0x9000, scoped, tag = 'internal scratch']
  #allocation2 [shape = 'f32[1,1]{1,0:T(1,128)S(1)}', space=vmem, size = 0x200, scoped, tag = 'scoped memory for model_d_forward.5']
  %s0 = inlined_call_operand.vmem [shape: f32[2,2048], index: 0, kind: input, shape index: {}]
  %s1 = inlined_call_operand.vmem [shape: f32[1,2048], index: 1, kind: input, shape index: {}]
  %s2 = inlined_call_operand.vmem [shape: f32[1,2048], index: 2, kind: input, shape index: {}]
  %s3 = inlined_call_operand.vmem [shape: bf16[2048,64], index: 3, kind: input, shape index: {}]
  %s4 = inlined_call_operand.vmem [shape: f32[1,64], index: 4, kind: input, shape index: {}]
  %s5 = inlined_call_operand.vmem [shape: f32[1,64], index: 5, kind: input, shape index: {}]
  %s6 = inlined_call_operand.<no memory space> [shape: f32[1,1], index: 6, kind: input, shape index: {}]
  %s7 = inlined_call_operand.vmem [shape: f32[2,1], index: 7, kind: output, shape index: {}]
  %s8 = sld [smem:[#allocation0]]
  $region38: #{model_d_forward.5} parent=0
    _
  %s10 = ssub.s32 1, %s8
  %s11 = scalar_select 0, %s10, %s8
  %v12 = vstv %s6
  %13 = vst [vmem:[#allocation2] sm:$0x1] %v12
  // Predicated region
  $region2: #{model_d_forward.5} parent=0 // pred_check
    _
  $region3: #{model_d_forward.5} parent=0 // pred_check_branch
    %15 = sbr.rel (0) target = $region5
  $region4: #{model_d_forward.5} parent=0 // pred_region
    _
  $region5: #{model_d_forward.5} parent=0 // pred_fallthru
    _
  // Predicated region
  $region6: #{model_d_forward.5} parent=0 // pred_check
    _
  $region7: #{model_d_forward.5} parent=0 // pred_check_branch
    %17 = sbr.rel (0) target = $region9
  $region8: #{model_d_forward.5} parent=0 // pred_region
    _
  $region9: #{model_d_forward.5} parent=0 // pred_fallthru
    _
  // Predicated region
  $region10: #{model_d_forward.5} parent=0 // pred_check
    _
  $region11: #{model_d_forward.5} parent=0 // pred_check_branch
    %19 = sbr.rel (0) target = $region13
  $region12: #{model_d_forward.5} parent=0 // pred_region
    _
  $region13: #{model_d_forward.5} parent=0 // pred_fallthru
    _
  // Predicated region
  $region14: #{model_d_forward.5} parent=0 // pred_check
    _
  $region15: #{model_d_forward.5} parent=0 // pred_check_branch
    %21 = sbr.rel (0) target = $region17
  $region16: #{model_d_forward.5} parent=0 // pred_region
    _
  $region17: #{model_d_forward.5} parent=0 // pred_fallthru
    _
  // Predicated region
  $region18: #{model_d_forward.5} parent=0 // pred_check
    _
  $region19: #{model_d_forward.5} parent=0 // pred_check_branch
    %23 = sbr.rel (0) target = $region21
  $region20: #{model_d_forward.5} parent=0 // pred_region
    _
  $region21: #{model_d_forward.5} parent=0 // pred_fallthru
    _
  // Predicated region
  $region22: #{model_d_forward.5} parent=0 // pred_check
    _
  $region23: #{model_d_forward.5} parent=0 // pred_check_branch
    %25 = sbr.rel (0) target = $region25
  $region24: #{model_d_forward.5} parent=0 // pred_region
    _
  $region25: #{model_d_forward.5} parent=0 // pred_fallthru
    _
  // Predicated region
  $region26: #{model_d_forward.5} parent=0 // pred_check
    _
  $region27: #{model_d_forward.5} parent=0 // pred_check_branch
    %27 = sbr.rel (0) target = $region29
  $region28: #{model_d_forward.5} parent=0 // pred_region
    _
  $region29: #{model_d_forward.5} parent=0 // pred_fallthru
    _
  %v28 = vld [vmem:[%s0] sm:$0xff]
  %v29 = vld [vmem:[%s0 + $0x8] sm:$0xff]
  %v30 = vld [vmem:[%s0 + $0x10] sm:$0xff]
  %v31 = vld [vmem:[%s0 + $0x18] sm:$0xff]
  %v32 = vld [vmem:[%s1] sm:$0xff]
  %v33 = vld [vmem:[%s1 + $0x8] sm:$0xff]
  %v36 = vperm.slane %v32, 0
  %v37 = vperm.slane %v32, 1
  %v38 = vperm.slane %v32, 2
  %v39 = vperm.slane %v32, 3
  %v40 = vperm.slane %v32, 4
  %v41 = vperm.slane %v32, 5
  %v42 = vperm.slane %v32, 6
  %v43 = vperm.slane %v32, 7
  %v44 = vperm.slane %v33, 0
  %v45 = vperm.slane %v33, 1
  %v46 = vperm.slane %v33, 2
  %v47 = vperm.slane %v33, 3
  %v48 = vperm.slane %v33, 4
  %v49 = vperm.slane %v33, 5
  %v50 = vperm.slane %v33, 6
  %v51 = vperm.slane %v33, 7
  %v52 = vrot.slane %v37, 6
  %v53 = vrot.slane %v38, 4
  %v54 = vrot.slane %v39, 2
  %v55 = vrot.slane %v41, 6
  %v56 = vrot.slane %v42, 4
  %v57 = vrot.slane %v43, 2
  %v58 = vrot.slane %v45, 6
  %v59 = vrot.slane %v46, 4
  %v60 = vrot.slane %v47, 2
  %v61 = vrot.slane %v49, 6
  %v62 = vrot.slane %v50, 4
  %v63 = vrot.slane %v51, 2
  %vm64 = vcmask 1041408
  %v65 = vsel %vm64, %v36, %v52
  %vm66 = vcmask 1045508
  %v67 = vsel %vm66, %v53, %v54
  %vm68 = vcmask 1043456
  %v69 = vsel %vm68, %v65, %v67
  %v70 = vsel %vm64, %v40, %v55
  %v71 = vsel %vm66, %v56, %v57
  %v72 = vsel %vm68, %v70, %v71
  %v73 = vsel %vm64, %v44, %v58
  %v74 = vsel %vm66, %v59, %v60
  %v75 = vsel %vm68, %v73, %v74
  %v76 = vsel %vm64, %v48, %v61
  %v77 = vsel %vm66, %v62, %v63
  %v78 = vsel %vm68, %v76, %v77
  %v83 = vmul.f32 %v28, %v69
  %v84 = vmul.f32 %v29, %v72
  %v85 = vmul.f32 %v30, %v75
  %v86 = vmul.f32 %v31, %v78
  %v87 = vld [vmem:[%s2] sm:$0xff]
  %v88 = vld [vmem:[%s2 + $0x8] sm:$0xff]
  %v91 = vperm.slane %v87, 0
  %v92 = vperm.slane %v87, 1
  %v93 = vperm.slane %v87, 2
  %v94 = vperm.slane %v87, 3
  %v95 = vperm.slane %v87, 4
  %v96 = vperm.slane %v87, 5
  %v97 = vperm.slane %v87, 6
  %v98 = vperm.slane %v87, 7
  %v99 = vperm.slane %v88, 0
  %v100 = vperm.slane %v88, 1
  %v101 = vperm.slane %v88, 2
  %v102 = vperm.slane %v88, 3
  %v103 = vperm.slane %v88, 4
  %v104 = vperm.slane %v88, 5
  %v105 = vperm.slane %v88, 6
  %v106 = vperm.slane %v88, 7
  %v107 = vrot.slane %v92, 6
  %v108 = vrot.slane %v93, 4
  %v109 = vrot.slane %v94, 2
  %v110 = vrot.slane %v96, 6
  %v111 = vrot.slane %v97, 4
  %v112 = vrot.slane %v98, 2
  %v113 = vrot.slane %v100, 6
  %v114 = vrot.slane %v101, 4
  %v115 = vrot.slane %v102, 2
  %v116 = vrot.slane %v104, 6
  %v117 = vrot.slane %v105, 4
  %v118 = vrot.slane %v106, 2
  %v119 = vsel %vm64, %v91, %v107
  %v120 = vsel %vm66, %v108, %v109
  %v121 = vsel %vm68, %v119, %v120
  %v122 = vsel %vm64, %v95, %v110
  %v123 = vsel %vm66, %v111, %v112
  %v124 = vsel %vm68, %v122, %v123
  %v125 = vsel %vm64, %v99, %v113
  %v126 = vsel %vm66, %v114, %v115
  %v127 = vsel %vm68, %v125, %v126
  %v128 = vsel %vm64, %v103, %v116
  %v129 = vsel %vm66, %v117, %v118
  %v130 = vsel %vm68, %v128, %v129
  %v135 = vadd.f32 %v83, %v121
  %v136 = vadd.f32 %v84, %v124
  %v137 = vadd.f32 %v85, %v127
  %v138 = vadd.f32 %v86, %v130
  %143 = vst [vmem:[#allocation1] ss:$4 sm:$0xff] %v135
  %s144 = scalar_lea.vmem [#allocation1], 32
  %145 = vst [vmem:[%s144] ss:$4 sm:$0xff] %v136
  %v146 = vld.sshfl [vmem:[#allocation1] sm:$0xff pattern:$0x73625140]
  %v147 = vld.sshfl [vmem:[#allocation1 + $0x8] sm:$0xff pattern:$0x73625140]
  %v148 = vld.sshfl [vmem:[#allocation1 + $0x10] sm:$0xff pattern:$0x73625140]
  %v149 = vld.sshfl [vmem:[#allocation1 + $0x18] sm:$0xff pattern:$0x73625140]
  %v150 = vld.sshfl [vmem:[#allocation1 + $0x20] sm:$0xff pattern:$0x73625140]
  %v151 = vld.sshfl [vmem:[#allocation1 + $0x28] sm:$0xff pattern:$0x73625140]
  %v152 = vld.sshfl [vmem:[#allocation1 + $0x30] sm:$0xff pattern:$0x73625140]
  %v153 = vld.sshfl [vmem:[#allocation1 + $0x38] sm:$0xff pattern:$0x73625140]
  %154 = vst [vmem:[#allocation1] ss:$4 sm:$0xff] %v137
  %155 = vst [vmem:[%s144] ss:$4 sm:$0xff] %v138
  %v156 = vld.sshfl [vmem:[#allocation1] sm:$0xff pattern:$0x73625140]
  %v157 = vld.sshfl [vmem:[#allocation1 + $0x8] sm:$0xff pattern:$0x73625140]
  %v158 = vld.sshfl [vmem:[#allocation1 + $0x10] sm:$0xff pattern:$0x73625140]
  %v159 = vld.sshfl [vmem:[#allocation1 + $0x18] sm:$0xff pattern:$0x73625140]
  %v160 = vld.sshfl [vmem:[#allocation1 + $0x20] sm:$0xff pattern:$0x73625140]
  %v161 = vld.sshfl [vmem:[#allocation1 + $0x28] sm:$0xff pattern:$0x73625140]
  %v162 = vld.sshfl [vmem:[#allocation1 + $0x30] sm:$0xff pattern:$0x73625140]
  %v163 = vld.sshfl [vmem:[#allocation1 + $0x38] sm:$0xff pattern:$0x73625140]
  %v180 = vpack.c.bf16 %v146, %v146
  %v181 = vpack.c.bf16 %v147, %v147
  %v182 = vpack.c.bf16 %v148, %v148
  %v183 = vpack.c.bf16 %v149, %v149
  %v184 = vpack.c.bf16 %v150, %v150
  %v185 = vpack.c.bf16 %v151, %v151
  %v186 = vpack.c.bf16 %v152, %v152
  %v187 = vpack.c.bf16 %v153, %v153
  %v188 = vpack.c.bf16 %v156, %v156
  %v189 = vpack.c.bf16 %v157, %v157
  %v190 = vpack.c.bf16 %v158, %v158
  %v191 = vpack.c.bf16 %v159, %v159
  %v192 = vpack.c.bf16 %v160, %v160
  %v193 = vpack.c.bf16 %v161, %v161
  %v194 = vpack.c.bf16 %v162, %v162
  %v195 = vpack.c.bf16 %v163, %v163
  %v196 = vld [vmem:[%s3] sm:$0xf]
  %v197 = vld [vmem:[%s3 + $0x4] sm:$0xf]
  %v198 = vld [vmem:[%s3 + $0x8] sm:$0xf]
  %v199 = vld [vmem:[%s3 + $0xc] sm:$0xf]
  %v200 = vld [vmem:[%s3 + $0x10] sm:$0xf]
  %v201 = vld [vmem:[%s3 + $0x14] sm:$0xf]
  %v202 = vld [vmem:[%s3 + $0x18] sm:$0xf]
  %v203 = vld [vmem:[%s3 + $0x1c] sm:$0xf]
  %v204 = vld [vmem:[%s3 + $0x20] sm:$0xf]
  %v205 = vld [vmem:[%s3 + $0x24] sm:$0xf]
  %v206 = vld [vmem:[%s3 + $0x28] sm:$0xf]
  %v207 = vld [vmem:[%s3 + $0x2c] sm:$0xf]
  %v208 = vld [vmem:[%s3 + $0x30] sm:$0xf]
  %v209 = vld [vmem:[%s3 + $0x34] sm:$0xf]
  %v210 = vld [vmem:[%s3 + $0x38] sm:$0xf]
  %v211 = vld [vmem:[%s3 + $0x3c] sm:$0xf]
  %v212 = vld [vmem:[%s3 + $0x40] sm:$0xf]
  %v213 = vld [vmem:[%s3 + $0x44] sm:$0xf]
  %v214 = vld [vmem:[%s3 + $0x48] sm:$0xf]
  %v215 = vld [vmem:[%s3 + $0x4c] sm:$0xf]
  %v216 = vld [vmem:[%s3 + $0x50] sm:$0xf]
  %v217 = vld [vmem:[%s3 + $0x54] sm:$0xf]
  %v218 = vld [vmem:[%s3 + $0x58] sm:$0xf]
  %v219 = vld [vmem:[%s3 + $0x5c] sm:$0xf]
  %v220 = vld [vmem:[%s3 + $0x60] sm:$0xf]
  %v221 = vld [vmem:[%s3 + $0x64] sm:$0xf]
  %v222 = vld [vmem:[%s3 + $0x68] sm:$0xf]
  %v223 = vld [vmem:[%s3 + $0x6c] sm:$0xf]
  %v224 = vld [vmem:[%s3 + $0x70] sm:$0xf]
  %v225 = vld [vmem:[%s3 + $0x74] sm:$0xf]
  %v226 = vld [vmem:[%s3 + $0x78] sm:$0xf]
  %v227 = vld [vmem:[%s3 + $0x7c] sm:$0xf]
  %v228 = vld [vmem:[%s3 + $0x80] sm:$0xf]
  %v229 = vld [vmem:[%s3 + $0x84] sm:$0xf]
  %v230 = vld [vmem:[%s3 + $0x88] sm:$0xf]
  %v231 = vld [vmem:[%s3 + $0x8c] sm:$0xf]
  %v232 = vld [vmem:[%s3 + $0x90] sm:$0xf]
  %v233 = vld [vmem:[%s3 + $0x94] sm:$0xf]
  %v234 = vld [vmem:[%s3 + $0x98] sm:$0xf]
  %v235 = vld [vmem:[%s3 + $0x9c] sm:$0xf]
  %v236 = vld [vmem:[%s3 + $0xa0] sm:$0xf]
  %v237 = vld [vmem:[%s3 + $0xa4] sm:$0xf]
  %v238 = vld [vmem:[%s3 + $0xa8] sm:$0xf]
  %v239 = vld [vmem:[%s3 + $0xac] sm:$0xf]
  %v240 = vld [vmem:[%s3 + $0xb0] sm:$0xf]
  %v241 = vld [vmem:[%s3 + $0xb4] sm:$0xf]
  %v242 = vld [vmem:[%s3 + $0xb8] sm:$0xf]
  %v243 = vld [vmem:[%s3 + $0xbc] sm:$0xf]
  %v244 = vld [vmem:[%s3 + $0xc0] sm:$0xf]
  %v245 = vld [vmem:[%s3 + $0xc4] sm:$0xf]
  %v246 = vld [vmem:[%s3 + $0xc8] sm:$0xf]
  %v247 = vld [vmem:[%s3 + $0xcc] sm:$0xf]
  %v248 = vld [vmem:[%s3 + $0xd0] sm:$0xf]
  %v249 = vld [vmem:[%s3 + $0xd4] sm:$0xf]
  %v250 = vld [vmem:[%s3 + $0xd8] sm:$0xf]
  %v251 = vld [vmem:[%s3 + $0xdc] sm:$0xf]
  %v252 = vld [vmem:[%s3 + $0xe0] sm:$0xf]
  %v253 = vld [vmem:[%s3 + $0xe4] sm:$0xf]
  %v254 = vld [vmem:[%s3 + $0xe8] sm:$0xf]
  %v255 = vld [vmem:[%s3 + $0xec] sm:$0xf]
  %v256 = vld [vmem:[%s3 + $0xf0] sm:$0xf]
  %v257 = vld [vmem:[%s3 + $0xf4] sm:$0xf]
  %v258 = vld [vmem:[%s3 + $0xf8] sm:$0xf]
  %v259 = vld [vmem:[%s3 + $0xfc] sm:$0xf]
  %v260 = vld [vmem:[%s3 + $0x100] sm:$0xf]
  %v261 = vld [vmem:[%s3 + $0x104] sm:$0xf]
  %v262 = vld [vmem:[%s3 + $0x108] sm:$0xf]
  %v263 = vld [vmem:[%s3 + $0x10c] sm:$0xf]
  %v264 = vld [vmem:[%s3 + $0x110] sm:$0xf]
  %v265 = vld [vmem:[%s3 + $0x114] sm:$0xf]
  %v266 = vld [vmem:[%s3 + $0x118] sm:$0xf]
  %v267 = vld [vmem:[%s3 + $0x11c] sm:$0xf]
  %v268 = vld [vmem:[%s3 + $0x120] sm:$0xf]
  %v269 = vld [vmem:[%s3 + $0x124] sm:$0xf]
  %v270 = vld [vmem:[%s3 + $0x128] sm:$0xf]
  %v271 = vld [vmem:[%s3 + $0x12c] sm:$0xf]
  %v272 = vld [vmem:[%s3 + $0x130] sm:$0xf]
  %v273 = vld [vmem:[%s3 + $0x134] sm:$0xf]
  %v274 = vld [vmem:[%s3 + $0x138] sm:$0xf]
  %v275 = vld [vmem:[%s3 + $0x13c] sm:$0xf]
  %v276 = vld [vmem:[%s3 + $0x140] sm:$0xf]
  %v277 = vld [vmem:[%s3 + $0x144] sm:$0xf]
  %v278 = vld [vmem:[%s3 + $0x148] sm:$0xf]
  %v279 = vld [vmem:[%s3 + $0x14c] sm:$0xf]
  %v280 = vld [vmem:[%s3 + $0x150] sm:$0xf]
  %v281 = vld [vmem:[%s3 + $0x154] sm:$0xf]
  %v282 = vld [vmem:[%s3 + $0x158] sm:$0xf]
  %v283 = vld [vmem:[%s3 + $0x15c] sm:$0xf]
  %v284 = vld [vmem:[%s3 + $0x160] sm:$0xf]
  %v285 = vld [vmem:[%s3 + $0x164] sm:$0xf]
  %v286 = vld [vmem:[%s3 + $0x168] sm:$0xf]
  %v287 = vld [vmem:[%s3 + $0x16c] sm:$0xf]
  %v288 = vld [vmem:[%s3 + $0x170] sm:$0xf]
  %v289 = vld [vmem:[%s3 + $0x174] sm:$0xf]
  %v290 = vld [vmem:[%s3 + $0x178] sm:$0xf]
  %v291 = vld [vmem:[%s3 + $0x17c] sm:$0xf]
  %v292 = vld [vmem:[%s3 + $0x180] sm:$0xf]
  %v293 = vld [vmem:[%s3 + $0x184] sm:$0xf]
  %v294 = vld [vmem:[%s3 + $0x188] sm:$0xf]
  %v295 = vld [vmem:[%s3 + $0x18c] sm:$0xf]
  %v296 = vld [vmem:[%s3 + $0x190] sm:$0xf]
  %v297 = vld [vmem:[%s3 + $0x194] sm:$0xf]
  %v298 = vld [vmem:[%s3 + $0x198] sm:$0xf]
  %v299 = vld [vmem:[%s3 + $0x19c] sm:$0xf]
  %v300 = vld [vmem:[%s3 + $0x1a0] sm:$0xf]
  %v301 = vld [vmem:[%s3 + $0x1a4] sm:$0xf]
  %v302 = vld [vmem:[%s3 + $0x1a8] sm:$0xf]
  %v303 = vld [vmem:[%s3 + $0x1ac] sm:$0xf]
  %v304 = vld [vmem:[%s3 + $0x1b0] sm:$0xf]
  %v305 = vld [vmem:[%s3 + $0x1b4] sm:$0xf]
  %v306 = vld [vmem:[%s3 + $0x1b8] sm:$0xf]
  %v307 = vld [vmem:[%s3 + $0x1bc] sm:$0xf]
  %v308 = vld [vmem:[%s3 + $0x1c0] sm:$0xf]
  %v309 = vld [vmem:[%s3 + $0x1c4] sm:$0xf]
  %v310 = vld [vmem:[%s3 + $0x1c8] sm:$0xf]
  %v311 = vld [vmem:[%s3 + $0x1cc] sm:$0xf]
  %v312 = vld [vmem:[%s3 + $0x1d0] sm:$0xf]
  %v313 = vld [vmem:[%s3 + $0x1d4] sm:$0xf]
  %v314 = vld [vmem:[%s3 + $0x1d8] sm:$0xf]
  %v315 = vld [vmem:[%s3 + $0x1dc] sm:$0xf]
  %v316 = vld [vmem:[%s3 + $0x1e0] sm:$0xf]
  %v317 = vld [vmem:[%s3 + $0x1e4] sm:$0xf]
  %v318 = vld [vmem:[%s3 + $0x1e8] sm:$0xf]
  %v319 = vld [vmem:[%s3 + $0x1ec] sm:$0xf]
  %v320 = vld [vmem:[%s3 + $0x1f0] sm:$0xf]
  %v321 = vld [vmem:[%s3 + $0x1f4] sm:$0xf]
  %v322 = vld [vmem:[%s3 + $0x1f8] sm:$0xf]
  %v323 = vld [vmem:[%s3 + $0x1fc] sm:$0xf]
  %v324 = vld [vmem:[%s3 + $0x200] sm:$0xf]
  %v325 = vld [vmem:[%s3 + $0x204] sm:$0xf]
  %v326 = vld [vmem:[%s3 + $0x208] sm:$0xf]
  %v327 = vld [vmem:[%s3 + $0x20c] sm:$0xf]
  %v328 = vld [vmem:[%s3 + $0x210] sm:$0xf]
  %v329 = vld [vmem:[%s3 + $0x214] sm:$0xf]
  %v330 = vld [vmem:[%s3 + $0x218] sm:$0xf]
  %v331 = vld [vmem:[%s3 + $0x21c] sm:$0xf]
  %v332 = vld [vmem:[%s3 + $0x220] sm:$0xf]
  %v333 = vld [vmem:[%s3 + $0x224] sm:$0xf]
  %v334 = vld [vmem:[%s3 + $0x228] sm:$0xf]
  %v335 = vld [vmem:[%s3 + $0x22c] sm:$0xf]
  %v336 = vld [vmem:[%s3 + $0x230] sm:$0xf]
  %v337 = vld [vmem:[%s3 + $0x234] sm:$0xf]
  %v338 = vld [vmem:[%s3 + $0x238] sm:$0xf]
  %v339 = vld [vmem:[%s3 + $0x23c] sm:$0xf]
  %v340 = vld [vmem:[%s3 + $0x240] sm:$0xf]
  %v341 = vld [vmem:[%s3 + $0x244] sm:$0xf]
  %v342 = vld [vmem:[%s3 + $0x248] sm:$0xf]
  %v343 = vld [vmem:[%s3 + $0x24c] sm:$0xf]
  %v344 = vld [vmem:[%s3 + $0x250] sm:$0xf]
  %v345 = vld [vmem:[%s3 + $0x254] sm:$0xf]
  %v346 = vld [vmem:[%s3 + $0x258] sm:$0xf]
  %v347 = vld [vmem:[%s3 + $0x25c] sm:$0xf]
  %v348 = vld [vmem:[%s3 + $0x260] sm:$0xf]
  %v349 = vld [vmem:[%s3 + $0x264] sm:$0xf]
  %v350 = vld [vmem:[%s3 + $0x268] sm:$0xf]
  %v351 = vld [vmem:[%s3 + $0x26c] sm:$0xf]
  %v352 = vld [vmem:[%s3 + $0x270] sm:$0xf]
  %v353 = vld [vmem:[%s3 + $0x274] sm:$0xf]
  %v354 = vld [vmem:[%s3 + $0x278] sm:$0xf]
  %v355 = vld [vmem:[%s3 + $0x27c] sm:$0xf]
  %v356 = vld [vmem:[%s3 + $0x280] sm:$0xf]
  %v357 = vld [vmem:[%s3 + $0x284] sm:$0xf]
  %v358 = vld [vmem:[%s3 + $0x288] sm:$0xf]
  %v359 = vld [vmem:[%s3 + $0x28c] sm:$0xf]
  %v360 = vld [vmem:[%s3 + $0x290] sm:$0xf]
  %v361 = vld [vmem:[%s3 + $0x294] sm:$0xf]
  %v362 = vld [vmem:[%s3 + $0x298] sm:$0xf]
  %v363 = vld [vmem:[%s3 + $0x29c] sm:$0xf]
  %v364 = vld [vmem:[%s3 + $0x2a0] sm:$0xf]
  %v365 = vld [vmem:[%s3 + $0x2a4] sm:$0xf]
  %v366 = vld [vmem:[%s3 + $0x2a8] sm:$0xf]
  %v367 = vld [vmem:[%s3 + $0x2ac] sm:$0xf]
  %v368 = vld [vmem:[%s3 + $0x2b0] sm:$0xf]
  %v369 = vld [vmem:[%s3 + $0x2b4] sm:$0xf]
  %v370 = vld [vmem:[%s3 + $0x2b8] sm:$0xf]
  %v371 = vld [vmem:[%s3 + $0x2bc] sm:$0xf]
  %v372 = vld [vmem:[%s3 + $0x2c0] sm:$0xf]
  %v373 = vld [vmem:[%s3 + $0x2c4] sm:$0xf]
  %v374 = vld [vmem:[%s3 + $0x2c8] sm:$0xf]
  %v375 = vld [vmem:[%s3 + $0x2cc] sm:$0xf]
  %v376 = vld [vmem:[%s3 + $0x2d0] sm:$0xf]
  %v377 = vld [vmem:[%s3 + $0x2d4] sm:$0xf]
  %v378 = vld [vmem:[%s3 + $0x2d8] sm:$0xf]
  %v379 = vld [vmem:[%s3 + $0x2dc] sm:$0xf]
  %v380 = vld [vmem:[%s3 + $0x2e0] sm:$0xf]
  %v381 = vld [vmem:[%s3 + $0x2e4] sm:$0xf]
  %v382 = vld [vmem:[%s3 + $0x2e8] sm:$0xf]
  %v383 = vld [vmem:[%s3 + $0x2ec] sm:$0xf]
  %v384 = vld [vmem:[%s3 + $0x2f0] sm:$0xf]
  %v385 = vld [vmem:[%s3 + $0x2f4] sm:$0xf]
  %v386 = vld [vmem:[%s3 + $0x2f8] sm:$0xf]
  %v387 = vld [vmem:[%s3 + $0x2fc] sm:$0xf]
  %v388 = vld [vmem:[%s3 + $0x300] sm:$0xf]
  %v389 = vld [vmem:[%s3 + $0x304] sm:$0xf]
  %v390 = vld [vmem:[%s3 + $0x308] sm:$0xf]
  %v391 = vld [vmem:[%s3 + $0x30c] sm:$0xf]
  %v392 = vld [vmem:[%s3 + $0x310] sm:$0xf]
  %v393 = vld [vmem:[%s3 + $0x314] sm:$0xf]
  %v394 = vld [vmem:[%s3 + $0x318] sm:$0xf]
  %v395 = vld [vmem:[%s3 + $0x31c] sm:$0xf]
  %v396 = vld [vmem:[%s3 + $0x320] sm:$0xf]
  %v397 = vld [vmem:[%s3 + $0x324] sm:$0xf]
  %v398 = vld [vmem:[%s3 + $0x328] sm:$0xf]
  %v399 = vld [vmem:[%s3 + $0x32c] sm:$0xf]
  %v400 = vld [vmem:[%s3 + $0x330] sm:$0xf]
  %v401 = vld [vmem:[%s3 + $0x334] sm:$0xf]
  %v402 = vld [vmem:[%s3 + $0x338] sm:$0xf]
  %v403 = vld [vmem:[%s3 + $0x33c] sm:$0xf]
  %v404 = vld [vmem:[%s3 + $0x340] sm:$0xf]
  %v405 = vld [vmem:[%s3 + $0x344] sm:$0xf]
  %v406 = vld [vmem:[%s3 + $0x348] sm:$0xf]
  %v407 = vld [vmem:[%s3 + $0x34c] sm:$0xf]
  %v408 = vld [vmem:[%s3 + $0x350] sm:$0xf]
  %v409 = vld [vmem:[%s3 + $0x354] sm:$0xf]
  %v410 = vld [vmem:[%s3 + $0x358] sm:$0xf]
  %v411 = vld [vmem:[%s3 + $0x35c] sm:$0xf]
  %v412 = vld [vmem:[%s3 + $0x360] sm:$0xf]
  %v413 = vld [vmem:[%s3 + $0x364] sm:$0xf]
  %v414 = vld [vmem:[%s3 + $0x368] sm:$0xf]
  %v415 = vld [vmem:[%s3 + $0x36c] sm:$0xf]
  %v416 = vld [vmem:[%s3 + $0x370] sm:$0xf]
  %v417 = vld [vmem:[%s3 + $0x374] sm:$0xf]
  %v418 = vld [vmem:[%s3 + $0x378] sm:$0xf]
  %v419 = vld [vmem:[%s3 + $0x37c] sm:$0xf]
  %v420 = vld [vmem:[%s3 + $0x380] sm:$0xf]
  %v421 = vld [vmem:[%s3 + $0x384] sm:$0xf]
  %v422 = vld [vmem:[%s3 + $0x388] sm:$0xf]
  %v423 = vld [vmem:[%s3 + $0x38c] sm:$0xf]
  %v424 = vld [vmem:[%s3 + $0x390] sm:$0xf]
  %v425 = vld [vmem:[%s3 + $0x394] sm:$0xf]
  %v426 = vld [vmem:[%s3 + $0x398] sm:$0xf]
  %v427 = vld [vmem:[%s3 + $0x39c] sm:$0xf]
  %v428 = vld [vmem:[%s3 + $0x3a0] sm:$0xf]
  %v429 = vld [vmem:[%s3 + $0x3a4] sm:$0xf]
  %v430 = vld [vmem:[%s3 + $0x3a8] sm:$0xf]
  %v431 = vld [vmem:[%s3 + $0x3ac] sm:$0xf]
  %v432 = vld [vmem:[%s3 + $0x3b0] sm:$0xf]
  %v433 = vld [vmem:[%s3 + $0x3b4] sm:$0xf]
  %v434 = vld [vmem:[%s3 + $0x3b8] sm:$0xf]
  %v435 = vld [vmem:[%s3 + $0x3bc] sm:$0xf]
  %v436 = vld [vmem:[%s3 + $0x3c0] sm:$0xf]
  %v437 = vld [vmem:[%s3 + $0x3c4] sm:$0xf]
  %v438 = vld [vmem:[%s3 + $0x3c8] sm:$0xf]
  %v439 = vld [vmem:[%s3 + $0x3cc] sm:$0xf]
  %v440 = vld [vmem:[%s3 + $0x3d0] sm:$0xf]
  %v441 = vld [vmem:[%s3 + $0x3d4] sm:$0xf]
  %v442 = vld [vmem:[%s3 + $0x3d8] sm:$0xf]
  %v443 = vld [vmem:[%s3 + $0x3dc] sm:$0xf]
  %v444 = vld [vmem:[%s3 + $0x3e0] sm:$0xf]
  %v445 = vld [vmem:[%s3 + $0x3e4] sm:$0xf]
  %v446 = vld [vmem:[%s3 + $0x3e8] sm:$0xf]
  %v447 = vld [vmem:[%s3 + $0x3ec] sm:$0xf]
  %v448 = vld [vmem:[%s3 + $0x3f0] sm:$0xf]
  %v449 = vld [vmem:[%s3 + $0x3f4] sm:$0xf]
  %v450 = vld [vmem:[%s3 + $0x3f8] sm:$0xf]
  %v451 = vld [vmem:[%s3 + $0x3fc] sm:$0xf]
  %v452 = vld [vmem:[%s4] sm:$0x1]
  %v454 = vperm.slane %v452, 0
  %v712 = vunpack.c.l.b16 %v196
  %v713 = vunpack.c.l.b16 %v197
  %v714 = vunpack.c.l.b16 %v198
  %v715 = vunpack.c.l.b16 %v199
  %v716 = vunpack.c.l.b16 %v200
  %v717 = vunpack.c.l.b16 %v201
  %v718 = vunpack.c.l.b16 %v202
  %v719 = vunpack.c.l.b16 %v203
  %v720 = vunpack.c.l.b16 %v204
  %v721 = vunpack.c.l.b16 %v205
  %v722 = vunpack.c.l.b16 %v206
  %v723 = vunpack.c.l.b16 %v207
  %v724 = vunpack.c.l.b16 %v208
  %v725 = vunpack.c.l.b16 %v209
  %v726 = vunpack.c.l.b16 %v210
  %v727 = vunpack.c.l.b16 %v211
  %v728 = vunpack.c.l.b16 %v212
  %v729 = vunpack.c.l.b16 %v213
  %v730 = vunpack.c.l.b16 %v214
  %v731 = vunpack.c.l.b16 %v215
  %v732 = vunpack.c.l.b16 %v216
  %v733 = vunpack.c.l.b16 %v217
  %v734 = vunpack.c.l.b16 %v218
  %v735 = vunpack.c.l.b16 %v219
  %v736 = vunpack.c.l.b16 %v220
  %v737 = vunpack.c.l.b16 %v221
  %v738 = vunpack.c.l.b16 %v222
  %v739 = vunpack.c.l.b16 %v223
  %v740 = vunpack.c.l.b16 %v224
  %v741 = vunpack.c.l.b16 %v225
  %v742 = vunpack.c.l.b16 %v226
  %v743 = vunpack.c.l.b16 %v227
  %v744 = vunpack.c.l.b16 %v228
  %v745 = vunpack.c.l.b16 %v229
  %v746 = vunpack.c.l.b16 %v230
  %v747 = vunpack.c.l.b16 %v231
  %v748 = vunpack.c.l.b16 %v232
  %v749 = vunpack.c.l.b16 %v233
  %v750 = vunpack.c.l.b16 %v234
  %v751 = vunpack.c.l.b16 %v235
  %v752 = vunpack.c.l.b16 %v236
  %v753 = vunpack.c.l.b16 %v237
  %v754 = vunpack.c.l.b16 %v238
  %v755 = vunpack.c.l.b16 %v239
  %v756 = vunpack.c.l.b16 %v240
  %v757 = vunpack.c.l.b16 %v241
  %v758 = vunpack.c.l.b16 %v242
  %v759 = vunpack.c.l.b16 %v243
  %v760 = vunpack.c.l.b16 %v244
  %v761 = vunpack.c.l.b16 %v245
  %v762 = vunpack.c.l.b16 %v246
  %v763 = vunpack.c.l.b16 %v247
  %v764 = vunpack.c.l.b16 %v248
  %v765 = vunpack.c.l.b16 %v249
  %v766 = vunpack.c.l.b16 %v250
  %v767 = vunpack.c.l.b16 %v251
  %v768 = vunpack.c.l.b16 %v252
  %v769 = vunpack.c.l.b16 %v253
  %v770 = vunpack.c.l.b16 %v254
  %v771 = vunpack.c.l.b16 %v255
  %v772 = vunpack.c.l.b16 %v256
  %v773 = vunpack.c.l.b16 %v257
  %v774 = vunpack.c.l.b16 %v258
  %v775 = vunpack.c.l.b16 %v259
  %v776 = vunpack.c.l.b16 %v260
  %v777 = vunpack.c.l.b16 %v261
  %v778 = vunpack.c.l.b16 %v262
  %v779 = vunpack.c.l.b16 %v263
  %v780 = vunpack.c.l.b16 %v264
  %v781 = vunpack.c.l.b16 %v265
  %v782 = vunpack.c.l.b16 %v266
  %v783 = vunpack.c.l.b16 %v267
  %v784 = vunpack.c.l.b16 %v268
  %v785 = vunpack.c.l.b16 %v269
  %v786 = vunpack.c.l.b16 %v270
  %v787 = vunpack.c.l.b16 %v271
  %v788 = vunpack.c.l.b16 %v272
  %v789 = vunpack.c.l.b16 %v273
  %v790 = vunpack.c.l.b16 %v274
  %v791 = vunpack.c.l.b16 %v275
  %v792 = vunpack.c.l.b16 %v276
  %v793 = vunpack.c.l.b16 %v277
  %v794 = vunpack.c.l.b16 %v278
  %v795 = vunpack.c.l.b16 %v279
  %v796 = vunpack.c.l.b16 %v280
  %v797 = vunpack.c.l.b16 %v281
  %v798 = vunpack.c.l.b16 %v282
  %v799 = vunpack.c.l.b16 %v283
  %v800 = vunpack.c.l.b16 %v284
  %v801 = vunpack.c.l.b16 %v285
  %v802 = vunpack.c.l.b16 %v286
  %v803 = vunpack.c.l.b16 %v287
  %v804 = vunpack.c.l.b16 %v288
  %v805 = vunpack.c.l.b16 %v289
  %v806 = vunpack.c.l.b16 %v290
  %v807 = vunpack.c.l.b16 %v291
  %v808 = vunpack.c.l.b16 %v292
  %v809 = vunpack.c.l.b16 %v293
  %v810 = vunpack.c.l.b16 %v294
  %v811 = vunpack.c.l.b16 %v295
  %v812 = vunpack.c.l.b16 %v296
  %v813 = vunpack.c.l.b16 %v297
  %v814 = vunpack.c.l.b16 %v298
  %v815 = vunpack.c.l.b16 %v299
  %v816 = vunpack.c.l.b16 %v300
  %v817 = vunpack.c.l.b16 %v301
  %v818 = vunpack.c.l.b16 %v302
  %v819 = vunpack.c.l.b16 %v303
  %v820 = vunpack.c.l.b16 %v304
  %v821 = vunpack.c.l.b16 %v305
  %v822 = vunpack.c.l.b16 %v306
  %v823 = vunpack.c.l.b16 %v307
  %v824 = vunpack.c.l.b16 %v308
  %v825 = vunpack.c.l.b16 %v309
  %v826 = vunpack.c.l.b16 %v310
  %v827 = vunpack.c.l.b16 %v311
  %v828 = vunpack.c.l.b16 %v312
  %v829 = vunpack.c.l.b16 %v313
  %v830 = vunpack.c.l.b16 %v314
  %v831 = vunpack.c.l.b16 %v315
  %v832 = vunpack.c.l.b16 %v316
  %v833 = vunpack.c.l.b16 %v317
  %v834 = vunpack.c.l.b16 %v318
  %v835 = vunpack.c.l.b16 %v319
  %v836 = vunpack.c.l.b16 %v320
  %v837 = vunpack.c.l.b16 %v321
  %v838 = vunpack.c.l.b16 %v322
  %v839 = vunpack.c.l.b16 %v323
  %v840 = vunpack.c.l.b16 %v324
  %v841 = vunpack.c.l.b16 %v325
  %v842 = vunpack.c.l.b16 %v326
  %v843 = vunpack.c.l.b16 %v327
  %v844 = vunpack.c.l.b16 %v328
  %v845 = vunpack.c.l.b16 %v329
  %v846 = vunpack.c.l.b16 %v330
  %v847 = vunpack.c.l.b16 %v331
  %v848 = vunpack.c.l.b16 %v332
  %v849 = vunpack.c.l.b16 %v333
  %v850 = vunpack.c.l.b16 %v334
  %v851 = vunpack.c.l.b16 %v335
  %v852 = vunpack.c.l.b16 %v336
  %v853 = vunpack.c.l.b16 %v337
  %v854 = vunpack.c.l.b16 %v338
  %v855 = vunpack.c.l.b16 %v339
  %v856 = vunpack.c.l.b16 %v340
  %v857 = vunpack.c.l.b16 %v341
  %v858 = vunpack.c.l.b16 %v342
  %v859 = vunpack.c.l.b16 %v343
  %v860 = vunpack.c.l.b16 %v344
  %v861 = vunpack.c.l.b16 %v345
  %v862 = vunpack.c.l.b16 %v346
  %v863 = vunpack.c.l.b16 %v347
  %v864 = vunpack.c.l.b16 %v348
  %v865 = vunpack.c.l.b16 %v349
  %v866 = vunpack.c.l.b16 %v350
  %v867 = vunpack.c.l.b16 %v351
  %v868 = vunpack.c.l.b16 %v352
  %v869 = vunpack.c.l.b16 %v353
  %v870 = vunpack.c.l.b16 %v354
  %v871 = vunpack.c.l.b16 %v355
  %v872 = vunpack.c.l.b16 %v356
  %v873 = vunpack.c.l.b16 %v357
  %v874 = vunpack.c.l.b16 %v358
  %v875 = vunpack.c.l.b16 %v359
  %v876 = vunpack.c.l.b16 %v360
  %v877 = vunpack.c.l.b16 %v361
  %v878 = vunpack.c.l.b16 %v362
  %v879 = vunpack.c.l.b16 %v363
  %v880 = vunpack.c.l.b16 %v364
  %v881 = vunpack.c.l.b16 %v365
  %v882 = vunpack.c.l.b16 %v366
  %v883 = vunpack.c.l.b16 %v367
  %v884 = vunpack.c.l.b16 %v368
  %v885 = vunpack.c.l.b16 %v369
  %v886 = vunpack.c.l.b16 %v370
  %v887 = vunpack.c.l.b16 %v371
  %v888 = vunpack.c.l.b16 %v372
  %v889 = vunpack.c.l.b16 %v373
  %v890 = vunpack.c.l.b16 %v374
  %v891 = vunpack.c.l.b16 %v375
  %v892 = vunpack.c.l.b16 %v376
  %v893 = vunpack.c.l.b16 %v377
  %v894 = vunpack.c.l.b16 %v378
  %v895 = vunpack.c.l.b16 %v379
  %v896 = vunpack.c.l.b16 %v380
  %v897 = vunpack.c.l.b16 %v381
  %v898 = vunpack.c.l.b16 %v382
  %v899 = vunpack.c.l.b16 %v383
  %v900 = vunpack.c.l.b16 %v384
  %v901 = vunpack.c.l.b16 %v385
  %v902 = vunpack.c.l.b16 %v386
  %v903 = vunpack.c.l.b16 %v387
  %v904 = vunpack.c.l.b16 %v388
  %v905 = vunpack.c.l.b16 %v389
  %v906 = vunpack.c.l.b16 %v390
  %v907 = vunpack.c.l.b16 %v391
  %v908 = vunpack.c.l.b16 %v392
  %v909 = vunpack.c.l.b16 %v393
  %v910 = vunpack.c.l.b16 %v394
  %v911 = vunpack.c.l.b16 %v395
  %v912 = vunpack.c.l.b16 %v396
  %v913 = vunpack.c.l.b16 %v397
  %v914 = vunpack.c.l.b16 %v398
  %v915 = vunpack.c.l.b16 %v399
  %v916 = vunpack.c.l.b16 %v400
  %v917 = vunpack.c.l.b16 %v401
  %v918 = vunpack.c.l.b16 %v402
  %v919 = vunpack.c.l.b16 %v403
  %v920 = vunpack.c.l.b16 %v404
  %v921 = vunpack.c.l.b16 %v405
  %v922 = vunpack.c.l.b16 %v406
  %v923 = vunpack.c.l.b16 %v407
  %v924 = vunpack.c.l.b16 %v408
  %v925 = vunpack.c.l.b16 %v409
  %v926 = vunpack.c.l.b16 %v410
  %v927 = vunpack.c.l.b16 %v411
  %v928 = vunpack.c.l.b16 %v412
  %v929 = vunpack.c.l.b16 %v413
  %v930 = vunpack.c.l.b16 %v414
  %v931 = vunpack.c.l.b16 %v415
  %v932 = vunpack.c.l.b16 %v416
  %v933 = vunpack.c.l.b16 %v417
  %v934 = vunpack.c.l.b16 %v418
  %v935 = vunpack.c.l.b16 %v419
  %v936 = vunpack.c.l.b16 %v420
  %v937 = vunpack.c.l.b16 %v421
  %v938 = vunpack.c.l.b16 %v422
  %v939 = vunpack.c.l.b16 %v423
  %v940 = vunpack.c.l.b16 %v424
  %v941 = vunpack.c.l.b16 %v425
  %v942 = vunpack.c.l.b16 %v426
  %v943 = vunpack.c.l.b16 %v427
  %v944 = vunpack.c.l.b16 %v428
  %v945 = vunpack.c.l.b16 %v429
  %v946 = vunpack.c.l.b16 %v430
  %v947 = vunpack.c.l.b16 %v431
  %v948 = vunpack.c.l.b16 %v432
  %v949 = vunpack.c.l.b16 %v433
  %v950 = vunpack.c.l.b16 %v434
  %v951 = vunpack.c.l.b16 %v435
  %v952 = vunpack.c.l.b16 %v436
  %v953 = vunpack.c.l.b16 %v437
  %v954 = vunpack.c.l.b16 %v438
  %v955 = vunpack.c.l.b16 %v439
  %v956 = vunpack.c.l.b16 %v440
  %v957 = vunpack.c.l.b16 %v441
  %v958 = vunpack.c.l.b16 %v442
  %v959 = vunpack.c.l.b16 %v443
  %v960 = vunpack.c.l.b16 %v444
  %v961 = vunpack.c.l.b16 %v445
  %v962 = vunpack.c.l.b16 %v446
  %v963 = vunpack.c.l.b16 %v447
  %v964 = vunpack.c.l.b16 %v448
  %v965 = vunpack.c.l.b16 %v449
  %v966 = vunpack.c.l.b16 %v450
  %v967 = vunpack.c.l.b16 %v451
  %v968 = vpack.c.b16 %v713, %v712
  %v969 = vpack.c.b16 %v715, %v714
  %v970 = vpack.c.b16 %v717, %v716
  %v971 = vpack.c.b16 %v719, %v718
  %v972 = vpack.c.b16 %v721, %v720
  %v973 = vpack.c.b16 %v723, %v722
  %v974 = vpack.c.b16 %v725, %v724
  %v975 = vpack.c.b16 %v727, %v726
  %v976 = vpack.c.b16 %v729, %v728
  %v977 = vpack.c.b16 %v731, %v730
  %v978 = vpack.c.b16 %v733, %v732
  %v979 = vpack.c.b16 %v735, %v734
  %v980 = vpack.c.b16 %v737, %v736
  %v981 = vpack.c.b16 %v739, %v738
  %v982 = vpack.c.b16 %v741, %v740
  %v983 = vpack.c.b16 %v743, %v742
  %v984 = vpack.c.b16 %v745, %v744
  %v985 = vpack.c.b16 %v747, %v746
  %v986 = vpack.c.b16 %v749, %v748
  %v987 = vpack.c.b16 %v751, %v750
  %v988 = vpack.c.b16 %v753, %v752
  %v989 = vpack.c.b16 %v755, %v754
  %v990 = vpack.c.b16 %v757, %v756
  %v991 = vpack.c.b16 %v759, %v758
  %v992 = vpack.c.b16 %v761, %v760
  %v993 = vpack.c.b16 %v763, %v762
  %v994 = vpack.c.b16 %v765, %v764
  %v995 = vpack.c.b16 %v767, %v766
  %v996 = vpack.c.b16 %v769, %v768
  %v997 = vpack.c.b16 %v771, %v770
  %v998 = vpack.c.b16 %v773, %v772
  %v999 = vpack.c.b16 %v775, %v774
  %v1000 = vpack.c.b16 %v777, %v776
  %v1001 = vpack.c.b16 %v779, %v778
  %v1002 = vpack.c.b16 %v781, %v780
  %v1003 = vpack.c.b16 %v783, %v782
  %v1004 = vpack.c.b16 %v785, %v784
  %v1005 = vpack.c.b16 %v787, %v786
  %v1006 = vpack.c.b16 %v789, %v788
  %v1007 = vpack.c.b16 %v791, %v790
  %v1008 = vpack.c.b16 %v793, %v792
  %v1009 = vpack.c.b16 %v795, %v794
  %v1010 = vpack.c.b16 %v797, %v796
  %v1011 = vpack.c.b16 %v799, %v798
  %v1012 = vpack.c.b16 %v801, %v800
  %v1013 = vpack.c.b16 %v803, %v802
  %v1014 = vpack.c.b16 %v805, %v804
  %v1015 = vpack.c.b16 %v807, %v806
  %v1016 = vpack.c.b16 %v809, %v808
  %v1017 = vpack.c.b16 %v811, %v810
  %v1018 = vpack.c.b16 %v813, %v812
  %v1019 = vpack.c.b16 %v815, %v814
  %v1020 = vpack.c.b16 %v817, %v816
  %v1021 = vpack.c.b16 %v819, %v818
  %v1022 = vpack.c.b16 %v821, %v820
  %v1023 = vpack.c.b16 %v823, %v822
  %v1024 = vpack.c.b16 %v825, %v824
  %v1025 = vpack.c.b16 %v827, %v826
  %v1026 = vpack.c.b16 %v829, %v828
  %v1027 = vpack.c.b16 %v831, %v830
  %v1028 = vpack.c.b16 %v833, %v832
  %v1029 = vpack.c.b16 %v835, %v834
  %v1030 = vpack.c.b16 %v837, %v836
  %v1031 = vpack.c.b16 %v839, %v838
  %v1032 = vpack.c.b16 %v841, %v840
  %v1033 = vpack.c.b16 %v843, %v842
  %v1034 = vpack.c.b16 %v845, %v844
  %v1035 = vpack.c.b16 %v847, %v846
  %v1036 = vpack.c.b16 %v849, %v848
  %v1037 = vpack.c.b16 %v851, %v850
  %v1038 = vpack.c.b16 %v853, %v852
  %v1039 = vpack.c.b16 %v855, %v854
  %v1040 = vpack.c.b16 %v857, %v856
  %v1041 = vpack.c.b16 %v859, %v858
  %v1042 = vpack.c.b16 %v861, %v860
  %v1043 = vpack.c.b16 %v863, %v862
  %v1044 = vpack.c.b16 %v865, %v864
  %v1045 = vpack.c.b16 %v867, %v866
  %v1046 = vpack.c.b16 %v869, %v868
  %v1047 = vpack.c.b16 %v871, %v870
  %v1048 = vpack.c.b16 %v873, %v872
  %v1049 = vpack.c.b16 %v875, %v874
  %v1050 = vpack.c.b16 %v877, %v876
  %v1051 = vpack.c.b16 %v879, %v878
  %v1052 = vpack.c.b16 %v881, %v880
  %v1053 = vpack.c.b16 %v883, %v882
  %v1054 = vpack.c.b16 %v885, %v884
  %v1055 = vpack.c.b16 %v887, %v886
  %v1056 = vpack.c.b16 %v889, %v888
  %v1057 = vpack.c.b16 %v891, %v890
  %v1058 = vpack.c.b16 %v893, %v892
  %v1059 = vpack.c.b16 %v895, %v894
  %v1060 = vpack.c.b16 %v897, %v896
  %v1061 = vpack.c.b16 %v899, %v898
  %v1062 = vpack.c.b16 %v901, %v900
  %v1063 = vpack.c.b16 %v903, %v902
  %v1064 = vpack.c.b16 %v905, %v904
  %v1065 = vpack.c.b16 %v907, %v906
  %v1066 = vpack.c.b16 %v909, %v908
  %v1067 = vpack.c.b16 %v911, %v910
  %v1068 = vpack.c.b16 %v913, %v912
  %v1069 = vpack.c.b16 %v915, %v914
  %v1070 = vpack.c.b16 %v917, %v916
  %v1071 = vpack.c.b16 %v919, %v918
  %v1072 = vpack.c.b16 %v921, %v920
  %v1073 = vpack.c.b16 %v923, %v922
  %v1074 = vpack.c.b16 %v925, %v924
  %v1075 = vpack.c.b16 %v927, %v926
  %v1076 = vpack.c.b16 %v929, %v928
  %v1077 = vpack.c.b16 %v931, %v930
  %v1078 = vpack.c.b16 %v933, %v932
  %v1079 = vpack.c.b16 %v935, %v934
  %v1080 = vpack.c.b16 %v937, %v936
  %v1081 = vpack.c.b16 %v939, %v938
  %v1082 = vpack.c.b16 %v941, %v940
  %v1083 = vpack.c.b16 %v943, %v942
  %v1084 = vpack.c.b16 %v945, %v944
  %v1085 = vpack.c.b16 %v947, %v946
  %v1086 = vpack.c.b16 %v949, %v948
  %v1087 = vpack.c.b16 %v951, %v950
  %v1088 = vpack.c.b16 %v953, %v952
  %v1089 = vpack.c.b16 %v955, %v954
  %v1090 = vpack.c.b16 %v957, %v956
  %v1091 = vpack.c.b16 %v959, %v958
  %v1092 = vpack.c.b16 %v961, %v960
  %v1093 = vpack.c.b16 %v963, %v962
  %v1094 = vpack.c.b16 %v965, %v964
  %v1095 = vpack.c.b16 %v967, %v966
  %1224 = vmatpush.bf16.msra.mxu0 %v975
  %1225 = vmatpush.bf16.msra.mxu0 %v974
  %1226 = vmatpush.bf16.msra.mxu0 %v973
  %1227 = vmatpush.bf16.msra.mxu0 %v972
  %1228 = vmatpush.bf16.msra.mxu0 %v971
  %1229 = vmatpush.bf16.msra.mxu0 %v970
  %1230 = vmatpush.bf16.msra.mxu0 %v969
  %1231 = vmatpush.bf16.msra.mxu0 %v968
  %1232 = vmatmul.bf16.gmra.mxu0 %v180
  %v1233 = vpop.f32.mrf.mxu0
  %v1234 = vadd.f32 %v454, %v1233
  %v1235 = vpop.f32.mrf.mxu0
  %1236 = vdwg.mxu0
  %1237 = vmatpush.bf16.msra.mxu0 %v983
  %1238 = vmatpush.bf16.msra.mxu0 %v982
  %1239 = vmatpush.bf16.msra.mxu0 %v981
  %1240 = vmatpush.bf16.msra.mxu0 %v980
  %1241 = vmatpush.bf16.msra.mxu0 %v979
  %1242 = vmatpush.bf16.msra.mxu0 %v978
  %1243 = vmatpush.bf16.msra.mxu0 %v977
  %1244 = vmatpush.bf16.msra.mxu0 %v976
  %1245 = vmatmul.bf16.gmra.mxu0 %v181
  %v1246 = vpop.f32.mrf.mxu0
  %v1247 = vadd.f32 %v1234, %v1246
  %v1248 = vpop.f32.mrf.mxu0
  %1249 = vdwg.mxu0
  %1250 = vmatpush.bf16.msra.mxu0 %v991
  %1251 = vmatpush.bf16.msra.mxu0 %v990
  %1252 = vmatpush.bf16.msra.mxu0 %v989
  %1253 = vmatpush.bf16.msra.mxu0 %v988
  %1254 = vmatpush.bf16.msra.mxu0 %v987
  %1255 = vmatpush.bf16.msra.mxu0 %v986
  %1256 = vmatpush.bf16.msra.mxu0 %v985
  %1257 = vmatpush.bf16.msra.mxu0 %v984
  %1258 = vmatmul.bf16.gmra.mxu0 %v182
  %v1259 = vpop.f32.mrf.mxu0
  %v1260 = vadd.f32 %v1247, %v1259
  %v1261 = vpop.f32.mrf.mxu0
  %1262 = vdwg.mxu0
  %1263 = vmatpush.bf16.msra.mxu0 %v999
  %1264 = vmatpush.bf16.msra.mxu0 %v998
  %1265 = vmatpush.bf16.msra.mxu0 %v997
  %1266 = vmatpush.bf16.msra.mxu0 %v996
  %1267 = vmatpush.bf16.msra.mxu0 %v995
  %1268 = vmatpush.bf16.msra.mxu0 %v994
  %1269 = vmatpush.bf16.msra.mxu0 %v993
  %1270 = vmatpush.bf16.msra.mxu0 %v992
  %1271 = vmatmul.bf16.gmra.mxu0 %v183
  %v1272 = vpop.f32.mrf.mxu0
  %v1273 = vadd.f32 %v1260, %v1272
  %v1274 = vpop.f32.mrf.mxu0
  %1275 = vdwg.mxu0
  %1276 = vmatpush.bf16.msra.mxu0 %v1007
  %1277 = vmatpush.bf16.msra.mxu0 %v1006
  %1278 = vmatpush.bf16.msra.mxu0 %v1005
  %1279 = vmatpush.bf16.msra.mxu0 %v1004
  %1280 = vmatpush.bf16.msra.mxu0 %v1003
  %1281 = vmatpush.bf16.msra.mxu0 %v1002
  %1282 = vmatpush.bf16.msra.mxu0 %v1001
  %1283 = vmatpush.bf16.msra.mxu0 %v1000
  %1284 = vmatmul.bf16.gmra.mxu0 %v184
  %v1285 = vpop.f32.mrf.mxu0
  %v1286 = vadd.f32 %v1273, %v1285
  %v1287 = vpop.f32.mrf.mxu0
  %1288 = vdwg.mxu0
  %1289 = vmatpush.bf16.msra.mxu0 %v1015
  %1290 = vmatpush.bf16.msra.mxu0 %v1014
  %1291 = vmatpush.bf16.msra.mxu0 %v1013
  %1292 = vmatpush.bf16.msra.mxu0 %v1012
  %1293 = vmatpush.bf16.msra.mxu0 %v1011
  %1294 = vmatpush.bf16.msra.mxu0 %v1010
  %1295 = vmatpush.bf16.msra.mxu0 %v1009
  %1296 = vmatpush.bf16.msra.mxu0 %v1008
  %1297 = vmatmul.bf16.gmra.mxu0 %v185
  %v1298 = vpop.f32.mrf.mxu0
  %v1299 = vadd.f32 %v1286, %v1298
  %v1300 = vpop.f32.mrf.mxu0
  %1301 = vdwg.mxu0
  %1302 = vmatpush.bf16.msra.mxu0 %v1023
  %1303 = vmatpush.bf16.msra.mxu0 %v1022
  %1304 = vmatpush.bf16.msra.mxu0 %v1021
  %1305 = vmatpush.bf16.msra.mxu0 %v1020
  %1306 = vmatpush.bf16.msra.mxu0 %v1019
  %1307 = vmatpush.bf16.msra.mxu0 %v1018
  %1308 = vmatpush.bf16.msra.mxu0 %v1017
  %1309 = vmatpush.bf16.msra.mxu0 %v1016
  %1310 = vmatmul.bf16.gmra.mxu0 %v186
  %v1311 = vpop.f32.mrf.mxu0
  %v1312 = vadd.f32 %v1299, %v1311
  %v1313 = vpop.f32.mrf.mxu0
  %1314 = vdwg.mxu0
  %1315 = vmatpush.bf16.msra.mxu0 %v1031
  %1316 = vmatpush.bf16.msra.mxu0 %v1030
  %1317 = vmatpush.bf16.msra.mxu0 %v1029
  %1318 = vmatpush.bf16.msra.mxu0 %v1028
  %1319 = vmatpush.bf16.msra.mxu0 %v1027
  %1320 = vmatpush.bf16.msra.mxu0 %v1026
  %1321 = vmatpush.bf16.msra.mxu0 %v1025
  %1322 = vmatpush.bf16.msra.mxu0 %v1024
  %1323 = vmatmul.bf16.gmra.mxu0 %v187
  %v1324 = vpop.f32.mrf.mxu0
  %v1325 = vadd.f32 %v1312, %v1324
  %v1326 = vpop.f32.mrf.mxu0
  %1327 = vdwg.mxu0
  %1328 = vmatpush.bf16.msra.mxu0 %v1039
  %1329 = vmatpush.bf16.msra.mxu0 %v1038
  %1330 = vmatpush.bf16.msra.mxu0 %v1037
  %1331 = vmatpush.bf16.msra.mxu0 %v1036
  %1332 = vmatpush.bf16.msra.mxu0 %v1035
  %1333 = vmatpush.bf16.msra.mxu0 %v1034
  %1334 = vmatpush.bf16.msra.mxu0 %v1033
  %1335 = vmatpush.bf16.msra.mxu0 %v1032
  %1336 = vmatmul.bf16.gmra.mxu0 %v188
  %v1337 = vpop.f32.mrf.mxu0
  %v1338 = vadd.f32 %v1325, %v1337
  %v1339 = vpop.f32.mrf.mxu0
  %1340 = vdwg.mxu0
  %1341 = vmatpush.bf16.msra.mxu0 %v1047
  %1342 = vmatpush.bf16.msra.mxu0 %v1046
  %1343 = vmatpush.bf16.msra.mxu0 %v1045
  %1344 = vmatpush.bf16.msra.mxu0 %v1044
  %1345 = vmatpush.bf16.msra.mxu0 %v1043
  %1346 = vmatpush.bf16.msra.mxu0 %v1042
  %1347 = vmatpush.bf16.msra.mxu0 %v1041
  %1348 = vmatpush.bf16.msra.mxu0 %v1040
  %1349 = vmatmul.bf16.gmra.mxu0 %v189
  %v1350 = vpop.f32.mrf.mxu0
  %v1351 = vadd.f32 %v1338, %v1350
  %v1352 = vpop.f32.mrf.mxu0
  %1353 = vdwg.mxu0
  %1354 = vmatpush.bf16.msra.mxu0 %v1055
  %1355 = vmatpush.bf16.msra.mxu0 %v1054
  %1356 = vmatpush.bf16.msra.mxu0 %v1053
  %1357 = vmatpush.bf16.msra.mxu0 %v1052
  %1358 = vmatpush.bf16.msra.mxu0 %v1051
  %1359 = vmatpush.bf16.msra.mxu0 %v1050
  %1360 = vmatpush.bf16.msra.mxu0 %v1049
  %1361 = vmatpush.bf16.msra.mxu0 %v1048
  %1362 = vmatmul.bf16.gmra.mxu0 %v190
  %v1363 = vpop.f32.mrf.mxu0
  %v1364 = vadd.f32 %v1351, %v1363
  %v1365 = vpop.f32.mrf.mxu0
  %1366 = vdwg.mxu0
  %1367 = vmatpush.bf16.msra.mxu0 %v1063
  %1368 = vmatpush.bf16.msra.mxu0 %v1062
  %1369 = vmatpush.bf16.msra.mxu0 %v1061
  %1370 = vmatpush.bf16.msra.mxu0 %v1060
  %1371 = vmatpush.bf16.msra.mxu0 %v1059
  %1372 = vmatpush.bf16.msra.mxu0 %v1058
  %1373 = vmatpush.bf16.msra.mxu0 %v1057
  %1374 = vmatpush.bf16.msra.mxu0 %v1056
  %1375 = vmatmul.bf16.gmra.mxu0 %v191
  %v1376 = vpop.f32.mrf.mxu0
  %v1377 = vadd.f32 %v1364, %v1376
  %v1378 = vpop.f32.mrf.mxu0
  %1379 = vdwg.mxu0
  %1380 = vmatpush.bf16.msra.mxu0 %v1071
  %1381 = vmatpush.bf16.msra.mxu0 %v1070
  %1382 = vmatpush.bf16.msra.mxu0 %v1069
  %1383 = vmatpush.bf16.msra.mxu0 %v1068
  %1384 = vmatpush.bf16.msra.mxu0 %v1067
  %1385 = vmatpush.bf16.msra.mxu0 %v1066
  %1386 = vmatpush.bf16.msra.mxu0 %v1065
  %1387 = vmatpush.bf16.msra.mxu0 %v1064
  %1388 = vmatmul.bf16.gmra.mxu0 %v192
  %v1389 = vpop.f32.mrf.mxu0
  %v1390 = vadd.f32 %v1377, %v1389
  %v1391 = vpop.f32.mrf.mxu0
  %1392 = vdwg.mxu0
  %1393 = vmatpush.bf16.msra.mxu0 %v1079
  %1394 = vmatpush.bf16.msra.mxu0 %v1078
  %1395 = vmatpush.bf16.msra.mxu0 %v1077
  %1396 = vmatpush.bf16.msra.mxu0 %v1076
  %1397 = vmatpush.bf16.msra.mxu0 %v1075
  %1398 = vmatpush.bf16.msra.mxu0 %v1074
  %1399 = vmatpush.bf16.msra.mxu0 %v1073
  %1400 = vmatpush.bf16.msra.mxu0 %v1072
  %1401 = vmatmul.bf16.gmra.mxu0 %v193
  %v1402 = vpop.f32.mrf.mxu0
  %v1403 = vadd.f32 %v1390, %v1402
  %v1404 = vpop.f32.mrf.mxu0
  %1405 = vdwg.mxu0
  %1406 = vmatpush.bf16.msra.mxu0 %v1087
  %1407 = vmatpush.bf16.msra.mxu0 %v1086
  %1408 = vmatpush.bf16.msra.mxu0 %v1085
  %1409 = vmatpush.bf16.msra.mxu0 %v1084
  %1410 = vmatpush.bf16.msra.mxu0 %v1083
  %1411 = vmatpush.bf16.msra.mxu0 %v1082
  %1412 = vmatpush.bf16.msra.mxu0 %v1081
  %1413 = vmatpush.bf16.msra.mxu0 %v1080
  %1414 = vmatmul.bf16.gmra.mxu0 %v194
  %v1415 = vpop.f32.mrf.mxu0
  %v1416 = vadd.f32 %v1403, %v1415
  %v1417 = vpop.f32.mrf.mxu0
  %1418 = vdwg.mxu0
  %1419 = vmatpush.bf16.msra.mxu0 %v1095
  %1420 = vmatpush.bf16.msra.mxu0 %v1094
  %1421 = vmatpush.bf16.msra.mxu0 %v1093
  %1422 = vmatpush.bf16.msra.mxu0 %v1092
  %1423 = vmatpush.bf16.msra.mxu0 %v1091
  %1424 = vmatpush.bf16.msra.mxu0 %v1090
  %1425 = vmatpush.bf16.msra.mxu0 %v1089
  %1426 = vmatpush.bf16.msra.mxu0 %v1088
  %1427 = vmatmul.bf16.gmra.mxu0 %v195
  %v1428 = vpop.f32.mrf.mxu0
  %v1429 = vadd.f32 %v1416, %v1428
  %v1430 = vpop.f32.mrf.mxu0
  %1431 = vdwg.mxu0
  %vm1432 = vcmp.ge.f32.partialorder %v1429, 0.0
  %v1433 = vmul.f32 %v1429, 0.2
  %v1434 = vsel %vm1432, %v1429, %v1433
  %v1435 = vld [vmem:[%s5] sm:$0x1]
  %v1437 = vperm.slane %v1435, 0
  %v1439 = vmul.f32 %v1434, %v1437
  %vm1440 = vcmask 517120
  %v1441 = vsel %vm1440, %v1439, 0.0
  %1442 = vadd.xlane.f32.xlu0 %v1441
  %v1443 = vpop.xlane.xlu0 %1442
  %v1444 = vld [vmem:[#allocation2] sm:$0x1]
  %v1446 = vperm.slane %v1444, 0
  %v1448 = vadd.f32 %v1443, %v1446
  %vm1449 = vcmask 1024
  %1450 = vst.msk [vmem:[%s7] sm:$0x3] %vm1449, %v1448
  // Predicated region
  $region30: #{model_d_forward.5} parent=0 // pred_check
    _
  $region31: #{model_d_forward.5} parent=0 // pred_check_branch
    %1452 = sbr.rel (0) target = $region33
  $region32: #{model_d_forward.5} parent=0 // pred_region
    _
  $region33: #{model_d_forward.5} parent=0 // pred_fallthru
    _
  // Predicated region
  $region34: #{model_d_forward.5} parent=0 // pred_check
    _
  $region35: #{model_d_forward.5} parent=0 // pred_check_branch
    %1454 = sbr.rel (0) target = $region37
  $region36: #{model_d_forward.5} parent=0 // pred_region
    _
  $region37: #{model_d_forward.5} parent=0 // pred_fallthru
    _

</llo_original>
